<compile_context>
chip_gen: v7x
topology: tpu7x:2x2x1
jax: 0.10.0
libtpu: 0.0.40
codegen_flags: <defaults>
</compile_context>

<pallas_src>
import functools
import math

import jax
import jax.numpy as jnp
from jax import lax
from jax.experimental import pallas as pl
from jax.experimental.pallas import tpu as pltpu  # noqa: F401  (TPU backend)


# ----------------------------------------------------------------------------
# Fused multi-head self-attention kernel — single invocation, everything
# (activations + weights) resident in VMEM.
#
#   x_ref     : (B, S, D)      input
#   w_in_ref  : (D, 3D)        in_proj weight, pre-transposed; Q cols pre-scaled
#   b_in_ref  : (1, 3D)        in_proj bias (Q slice pre-scaled)
#   w_out_ref : (D, D)         out_proj weight, pre-transposed (W_out^T)
#   b_out_ref : (1, D)         out_proj bias
#   mask_ref  : (B*S, B*S)     block-diagonal additive mask (0 / -1e30)
#   o_ref     : (B, S, D)      output
# ----------------------------------------------------------------------------
def _fused_mha_kernel(x_ref, w_in_ref, b_in_ref, w_out_ref, b_out_ref,
                      mask_ref, o_ref, *, heads, dh):
    B, S, D = x_ref.shape
    N = B * S

    # Flatten batch (leading-dim merge only — layout preserving).
    x = x_ref[...].reshape(N, D)

    # Fused QKV projection for the whole batch: one lane-dense MXU matmul.
    # 1/sqrt(dh) is already folded into the Q columns / Q bias on the host.
    qkv = (jnp.dot(x, w_in_ref[...], preferred_element_type=jnp.float32)
           + b_in_ref[...])                                   # (N, 3D) f32

    mask = mask_ref[...]                                      # (N, N)

    head_outs = []
    # Static unrolled head loop; heads are lane slices of the resident qkv
    # tile.  Width-dh slices are unavoidable at dh=4; see TODO above for the
    # scaled-up layout.
    for h in range(heads):
        lo = h * dh
        q = qkv[:, lo:lo + dh]                                # (N, dh)
        k = qkv[:, D + lo:D + lo + dh]                        # (N, dh)
        v = qkv[:, 2 * D + lo:2 * D + lo + dh]                # (N, dh)

        # scores = q @ k^T (contract dh axes; hidden relayout is tiny at dh=4)
        # + block-diagonal mask so cross-batch logits vanish after softmax.
        s = lax.dot_general(
            q, k,
            dimension_numbers=(((1,), (1,)), ((), ())),
            preferred_element_type=jnp.float32,
        ) + mask                                              # (N, N)

        # Numerically stable softmax; exact 1/l folded into the (N, dh) PV
        # result rather than the (N, N) probabilities.
        m = jnp.max(s, axis=-1, keepdims=True)
        p = jnp.exp(s - m)
        l = jnp.sum(p, axis=-1, keepdims=True)
        o_h = jnp.dot(p, v, preferred_element_type=jnp.float32)   # (N, dh)
        head_outs.append(o_h * pl.reciprocal(l, approx=False))

    # Head merge -> single lane-dense (N, D) slab, then ONE out_proj matmul.
    merged = jnp.concatenate(head_outs, axis=-1)              # (N, D)
    out = (jnp.dot(merged, w_out_ref[...], preferred_element_type=jnp.float32)
           + b_out_ref[...])                                  # (N, D)

    # Single whole-slab store.
    o_ref[...] = out.reshape(B, S, D).astype(o_ref.dtype)


# ----------------------------------------------------------------------------
# Wrapper: host-side (trace-time) weight re-layout + constant mask, then a
# single pallas_call with no grid (whole arrays live in VMEM).
# ----------------------------------------------------------------------------
def attention_forward(x, params, heads):
    B, S, D = x.shape
    assert D % heads == 0
    dh = D // heads
    scale = 1.0 / math.sqrt(dh)

    w_in = params["in_proj_weight"]     # (3D, D)
    b_in = params["in_proj_bias"]       # (3D,)
    w_out = params["out_proj_weight"]   # (D, D)
    b_out = params["out_proj_bias"]     # (D,)

    # Fold 1/sqrt(dh) into the Q projection (weights + bias) once at trace time.
    col_scale = jnp.concatenate(
        [jnp.full((D,), scale, w_in.dtype), jnp.ones((2 * D,), w_in.dtype)])
    w_in_t = w_in.T * col_scale[None, :]            # (D, 3D)
    b_in_row = (b_in * col_scale)[None, :]          # (1, 3D)
    w_out_t = w_out.T                               # (D, D)
    b_out_row = b_out[None, :]                      # (1, D)

    # Block-diagonal additive mask: row i may only attend to columns of the
    # same batch element.
    bid = jnp.arange(B * S, dtype=jnp.int32) // S
    mask = jnp.where(bid[:, None] == bid[None, :],
                     jnp.float32(0.0), jnp.float32(-1e30))    # (B*S, B*S)

    kernel = functools.partial(_fused_mha_kernel, heads=heads, dh=dh)

    return pl.pallas_call(
        kernel,
        out_shape=jax.ShapeDtypeStruct((B, S, D), x.dtype),
    )(x, w_in_t, b_in_row, w_out_t, b_out_row, mask)


# Pure-JAX reference (same math, unscaled weights) for correctness check.
def attention_reference(x, params, heads):
    B, S, D = x.shape
    dh = D // heads
    scale = 1.0 / math.sqrt(dh)
    qkv = x.reshape(B * S, D) @ params["in_proj_weight"].T + params["in_proj_bias"]
    q, k, v = jnp.split(qkv, 3, axis=-1)

    def sh(t):
        return t.reshape(B, S, heads, dh).transpose(0, 2, 1, 3)

    q, k, v = sh(q), sh(k), sh(v)
    s = jnp.einsum("bhqd,bhkd->bhqk", q, k) * scale
    p = jax.nn.softmax(s, axis=-1)
    o = jnp.einsum("bhqk,bhkd->bhqd", p, v)
    o = o.transpose(0, 2, 1, 3).reshape(B * S, D)
    out = o @ params["out_proj_weight"].T + params["out_proj_bias"]
    return out.reshape(B, S, D)


if __name__ == "__main__":
    B, S, D, H = 2, 8, 32, 8

    key = jax.random.PRNGKey(0)
    k_x, k_w_in, k_b_in, k_w_out, k_b_out = jax.random.split(key, 5)

    x = jax.random.normal(k_x, (B, S, D), dtype=jnp.float32)

    params = {
        "in_proj_weight": 0.02 * jax.random.normal(k_w_in, (3 * D, D), jnp.float32),
        "in_proj_bias": 0.02 * jax.random.normal(k_b_in, (3 * D,), jnp.float32),
        "out_proj_weight": 0.02 * jax.random.normal(k_w_out, (D, D), jnp.float32),
        "out_proj_bias": 0.02 * jax.random.normal(k_b_out, (D,), jnp.float32),
    }

    fwd = jax.jit(functools.partial(attention_forward, heads=H))
    out = jax.block_until_ready(fwd(x, params))

    ref = attention_reference(x, params, H)
    assert out.shape == (B, S, D)
    assert jnp.allclose(out, ref, atol=1e-4, rtol=1e-4), "mismatch vs reference"

    print("KERNEL_OK")
</pallas_src>

<mosaic_0001>
module attributes {stable_mosaic.version = 11 : i64} {
  func.func @_fused_mha_kernel(%arg0: memref<2x8x32xf32, #tpu.memory_space<vmem>>, %arg1: memref<32x96xf32, #tpu.memory_space<vmem>>, %arg2: memref<1x96xf32, #tpu.memory_space<vmem>>, %arg3: memref<32x32xf32, #tpu.memory_space<vmem>>, %arg4: memref<1x32xf32, #tpu.memory_space<vmem>>, %arg5: memref<16x16xf32, #tpu.memory_space<vmem>>, %arg6: memref<2x8x32xf32, #tpu.memory_space<vmem>>) attributes {dimension_semantics = [], scalar_prefetch = 0 : i64, scratch_operands = 0 : i64, tpu.core_type = #tpu.core_type<tc>} {
    %c0 = arith.constant 0 : index
    %c0_0 = arith.constant 0 : index
    %c0_1 = arith.constant 0 : index
    %0 = vector.load %arg0[%c0, %c0_0, %c0_1] : memref<2x8x32xf32, #tpu.memory_space<vmem>>, vector<2x8x32xf32>
    %1 = vector.shape_cast %0 : vector<2x8x32xf32> to vector<16x32xf32>
    %c0_2 = arith.constant 0 : index
    %c0_3 = arith.constant 0 : index
    %2 = vector.load %arg1[%c0_2, %c0_3] : memref<32x96xf32, #tpu.memory_space<vmem>>, vector<32x96xf32>
    %cst = arith.constant dense<0.000000e+00> : vector<16x96xf32>
    %3 = tpu.matmul %1, %2, %cst {dimension_numbers = #tpu.dot_dimension_numbers<[1], [0], [0], [1], [0, 0, 1, 1], [], []>} : vector<16x32xf32>, vector<32x96xf32>, vector<16x96xf32> -> vector<16x96xf32>
    %c0_4 = arith.constant 0 : index
    %c0_5 = arith.constant 0 : index
    %4 = vector.load %arg2[%c0_4, %c0_5] : memref<1x96xf32, #tpu.memory_space<vmem>>, vector<1x96xf32>
    %5 = vector.broadcast %4 : vector<1x96xf32> to vector<16x96xf32>
    %6 = arith.addf %3, %5 : vector<16x96xf32>
    %c0_6 = arith.constant 0 : index
    %c0_7 = arith.constant 0 : index
    %7 = vector.load %arg5[%c0_6, %c0_7] : memref<16x16xf32, #tpu.memory_space<vmem>>, vector<16x16xf32>
    %8 = vector.extract_strided_slice %6 {offsets = [0, 0], sizes = [16, 4], strides = [1, 1]} : vector<16x96xf32> to vector<16x4xf32>
    %9 = vector.extract_strided_slice %6 {offsets = [0, 32], sizes = [16, 4], strides = [1, 1]} : vector<16x96xf32> to vector<16x4xf32>
    %10 = vector.extract_strided_slice %6 {offsets = [0, 64], sizes = [16, 4], strides = [1, 1]} : vector<16x96xf32> to vector<16x4xf32>
    %cst_8 = arith.constant dense<0.000000e+00> : vector<16x16xf32>
    %11 = tpu.matmul %8, %9, %cst_8 {dimension_numbers = #tpu.dot_dimension_numbers<[1], [1], [0], [0], [0, 0, 1, 0], [], []>} : vector<16x4xf32>, vector<16x4xf32>, vector<16x16xf32> -> vector<16x16xf32>
    %12 = arith.addf %11, %7 : vector<16x16xf32>
    %cst_9 = arith.constant dense<0xFF800000> : vector<16xf32>
    %13 = vector.multi_reduction <maximumf>, %12, %cst_9 [1] : vector<16x16xf32> to vector<16xf32>
    %14 = vector.shape_cast %13 : vector<16xf32> to vector<16x1xf32>
    %15 = vector.broadcast %14 : vector<16x1xf32> to vector<16x16xf32>
    %16 = arith.subf %12, %15 : vector<16x16xf32>
    %17 = math.exp %16 : vector<16x16xf32>
    %cst_10 = arith.constant dense<0.000000e+00> : vector<16xf32>
    %18 = vector.multi_reduction <add>, %17, %cst_10 [1] : vector<16x16xf32> to vector<16xf32>
    %19 = vector.shape_cast %18 : vector<16xf32> to vector<16x1xf32>
    %cst_11 = arith.constant dense<0.000000e+00> : vector<16x4xf32>
    %20 = tpu.matmul %17, %10, %cst_11 {dimension_numbers = #tpu.dot_dimension_numbers<[1], [0], [0], [1], [0, 0, 1, 1], [], []>} : vector<16x16xf32>, vector<16x4xf32>, vector<16x4xf32> -> vector<16x4xf32>
    %21 = tpu.reciprocal %19 : vector<16x1xf32> -> vector<16x1xf32>
    %22 = vector.broadcast %21 : vector<16x1xf32> to vector<16x4xf32>
    %23 = arith.mulf %20, %22 : vector<16x4xf32>
    %24 = vector.extract_strided_slice %6 {offsets = [0, 4], sizes = [16, 4], strides = [1, 1]} : vector<16x96xf32> to vector<16x4xf32>
    %25 = vector.extract_strided_slice %6 {offsets = [0, 36], sizes = [16, 4], strides = [1, 1]} : vector<16x96xf32> to vector<16x4xf32>
    %26 = vector.extract_strided_slice %6 {offsets = [0, 68], sizes = [16, 4], strides = [1, 1]} : vector<16x96xf32> to vector<16x4xf32>
    %cst_12 = arith.constant dense<0.000000e+00> : vector<16x16xf32>
    %27 = tpu.matmul %24, %25, %cst_12 {dimension_numbers = #tpu.dot_dimension_numbers<[1], [1], [0], [0], [0, 0, 1, 0], [], []>} : vector<16x4xf32>, vector<16x4xf32>, vector<16x16xf32> -> vector<16x16xf32>
    %28 = arith.addf %27, %7 : vector<16x16xf32>
    %cst_13 = arith.constant dense<0xFF800000> : vector<16xf32>
    %29 = vector.multi_reduction <maximumf>, %28, %cst_13 [1] : vector<16x16xf32> to vector<16xf32>
    %30 = vector.shape_cast %29 : vector<16xf32> to vector<16x1xf32>
    %31 = vector.broadcast %30 : vector<16x1xf32> to vector<16x16xf32>
    %32 = arith.subf %28, %31 : vector<16x16xf32>
    %33 = math.exp %32 : vector<16x16xf32>
    %cst_14 = arith.constant dense<0.000000e+00> : vector<16xf32>
    %34 = vector.multi_reduction <add>, %33, %cst_14 [1] : vector<16x16xf32> to vector<16xf32>
    %35 = vector.shape_cast %34 : vector<16xf32> to vector<16x1xf32>
    %cst_15 = arith.constant dense<0.000000e+00> : vector<16x4xf32>
    %36 = tpu.matmul %33, %26, %cst_15 {dimension_numbers = #tpu.dot_dimension_numbers<[1], [0], [0], [1], [0, 0, 1, 1], [], []>} : vector<16x16xf32>, vector<16x4xf32>, vector<16x4xf32> -> vector<16x4xf32>
    %37 = tpu.reciprocal %35 : vector<16x1xf32> -> vector<16x1xf32>
    %38 = vector.broadcast %37 : vector<16x1xf32> to vector<16x4xf32>
    %39 = arith.mulf %36, %38 : vector<16x4xf32>
    %40 = vector.extract_strided_slice %6 {offsets = [0, 8], sizes = [16, 4], strides = [1, 1]} : vector<16x96xf32> to vector<16x4xf32>
    %41 = vector.extract_strided_slice %6 {offsets = [0, 40], sizes = [16, 4], strides = [1, 1]} : vector<16x96xf32> to vector<16x4xf32>
    %42 = vector.extract_strided_slice %6 {offsets = [0, 72], sizes = [16, 4], strides = [1, 1]} : vector<16x96xf32> to vector<16x4xf32>
    %cst_16 = arith.constant dense<0.000000e+00> : vector<16x16xf32>
    %43 = tpu.matmul %40, %41, %cst_16 {dimension_numbers = #tpu.dot_dimension_numbers<[1], [1], [0], [0], [0, 0, 1, 0], [], []>} : vector<16x4xf32>, vector<16x4xf32>, vector<16x16xf32> -> vector<16x16xf32>
    %44 = arith.addf %43, %7 : vector<16x16xf32>
    %cst_17 = arith.constant dense<0xFF800000> : vector<16xf32>
    %45 = vector.multi_reduction <maximumf>, %44, %cst_17 [1] : vector<16x16xf32> to vector<16xf32>
    %46 = vector.shape_cast %45 : vector<16xf32> to vector<16x1xf32>
    %47 = vector.broadcast %46 : vector<16x1xf32> to vector<16x16xf32>
    %48 = arith.subf %44, %47 : vector<16x16xf32>
    %49 = math.exp %48 : vector<16x16xf32>
    %cst_18 = arith.constant dense<0.000000e+00> : vector<16xf32>
    %50 = vector.multi_reduction <add>, %49, %cst_18 [1] : vector<16x16xf32> to vector<16xf32>
    %51 = vector.shape_cast %50 : vector<16xf32> to vector<16x1xf32>
    %cst_19 = arith.constant dense<0.000000e+00> : vector<16x4xf32>
    %52 = tpu.matmul %49, %42, %cst_19 {dimension_numbers = #tpu.dot_dimension_numbers<[1], [0], [0], [1], [0, 0, 1, 1], [], []>} : vector<16x16xf32>, vector<16x4xf32>, vector<16x4xf32> -> vector<16x4xf32>
    %53 = tpu.reciprocal %51 : vector<16x1xf32> -> vector<16x1xf32>
    %54 = vector.broadcast %53 : vector<16x1xf32> to vector<16x4xf32>
    %55 = arith.mulf %52, %54 : vector<16x4xf32>
    %56 = vector.extract_strided_slice %6 {offsets = [0, 12], sizes = [16, 4], strides = [1, 1]} : vector<16x96xf32> to vector<16x4xf32>
    %57 = vector.extract_strided_slice %6 {offsets = [0, 44], sizes = [16, 4], strides = [1, 1]} : vector<16x96xf32> to vector<16x4xf32>
    %58 = vector.extract_strided_slice %6 {offsets = [0, 76], sizes = [16, 4], strides = [1, 1]} : vector<16x96xf32> to vector<16x4xf32>
    %cst_20 = arith.constant dense<0.000000e+00> : vector<16x16xf32>
    %59 = tpu.matmul %56, %57, %cst_20 {dimension_numbers = #tpu.dot_dimension_numbers<[1], [1], [0], [0], [0, 0, 1, 0], [], []>} : vector<16x4xf32>, vector<16x4xf32>, vector<16x16xf32> -> vector<16x16xf32>
    %60 = arith.addf %59, %7 : vector<16x16xf32>
    %cst_21 = arith.constant dense<0xFF800000> : vector<16xf32>
    %61 = vector.multi_reduction <maximumf>, %60, %cst_21 [1] : vector<16x16xf32> to vector<16xf32>
    %62 = vector.shape_cast %61 : vector<16xf32> to vector<16x1xf32>
    %63 = vector.broadcast %62 : vector<16x1xf32> to vector<16x16xf32>
    %64 = arith.subf %60, %63 : vector<16x16xf32>
    %65 = math.exp %64 : vector<16x16xf32>
    %cst_22 = arith.constant dense<0.000000e+00> : vector<16xf32>
    %66 = vector.multi_reduction <add>, %65, %cst_22 [1] : vector<16x16xf32> to vector<16xf32>
    %67 = vector.shape_cast %66 : vector<16xf32> to vector<16x1xf32>
    %cst_23 = arith.constant dense<0.000000e+00> : vector<16x4xf32>
    %68 = tpu.matmul %65, %58, %cst_23 {dimension_numbers = #tpu.dot_dimension_numbers<[1], [0], [0], [1], [0, 0, 1, 1], [], []>} : vector<16x16xf32>, vector<16x4xf32>, vector<16x4xf32> -> vector<16x4xf32>
    %69 = tpu.reciprocal %67 : vector<16x1xf32> -> vector<16x1xf32>
    %70 = vector.broadcast %69 : vector<16x1xf32> to vector<16x4xf32>
    %71 = arith.mulf %68, %70 : vector<16x4xf32>
    %72 = vector.extract_strided_slice %6 {offsets = [0, 16], sizes = [16, 4], strides = [1, 1]} : vector<16x96xf32> to vector<16x4xf32>
    %73 = vector.extract_strided_slice %6 {offsets = [0, 48], sizes = [16, 4], strides = [1, 1]} : vector<16x96xf32> to vector<16x4xf32>
    %74 = vector.extract_strided_slice %6 {offsets = [0, 80], sizes = [16, 4], strides = [1, 1]} : vector<16x96xf32> to vector<16x4xf32>
    %cst_24 = arith.constant dense<0.000000e+00> : vector<16x16xf32>
    %75 = tpu.matmul %72, %73, %cst_24 {dimension_numbers = #tpu.dot_dimension_numbers<[1], [1], [0], [0], [0, 0, 1, 0], [], []>} : vector<16x4xf32>, vector<16x4xf32>, vector<16x16xf32> -> vector<16x16xf32>
    %76 = arith.addf %75, %7 : vector<16x16xf32>
    %cst_25 = arith.constant dense<0xFF800000> : vector<16xf32>
    %77 = vector.multi_reduction <maximumf>, %76, %cst_25 [1] : vector<16x16xf32> to vector<16xf32>
    %78 = vector.shape_cast %77 : vector<16xf32> to vector<16x1xf32>
    %79 = vector.broadcast %78 : vector<16x1xf32> to vector<16x16xf32>
    %80 = arith.subf %76, %79 : vector<16x16xf32>
    %81 = math.exp %80 : vector<16x16xf32>
    %cst_26 = arith.constant dense<0.000000e+00> : vector<16xf32>
    %82 = vector.multi_reduction <add>, %81, %cst_26 [1] : vector<16x16xf32> to vector<16xf32>
    %83 = vector.shape_cast %82 : vector<16xf32> to vector<16x1xf32>
    %cst_27 = arith.constant dense<0.000000e+00> : vector<16x4xf32>
    %84 = tpu.matmul %81, %74, %cst_27 {dimension_numbers = #tpu.dot_dimension_numbers<[1], [0], [0], [1], [0, 0, 1, 1], [], []>} : vector<16x16xf32>, vector<16x4xf32>, vector<16x4xf32> -> vector<16x4xf32>
    %85 = tpu.reciprocal %83 : vector<16x1xf32> -> vector<16x1xf32>
    %86 = vector.broadcast %85 : vector<16x1xf32> to vector<16x4xf32>
    %87 = arith.mulf %84, %86 : vector<16x4xf32>
    %88 = vector.extract_strided_slice %6 {offsets = [0, 20], sizes = [16, 4], strides = [1, 1]} : vector<16x96xf32> to vector<16x4xf32>
    %89 = vector.extract_strided_slice %6 {offsets = [0, 52], sizes = [16, 4], strides = [1, 1]} : vector<16x96xf32> to vector<16x4xf32>
    %90 = vector.extract_strided_slice %6 {offsets = [0, 84], sizes = [16, 4], strides = [1, 1]} : vector<16x96xf32> to vector<16x4xf32>
    %cst_28 = arith.constant dense<0.000000e+00> : vector<16x16xf32>
    %91 = tpu.matmul %88, %89, %cst_28 {dimension_numbers = #tpu.dot_dimension_numbers<[1], [1], [0], [0], [0, 0, 1, 0], [], []>} : vector<16x4xf32>, vector<16x4xf32>, vector<16x16xf32> -> vector<16x16xf32>
    %92 = arith.addf %91, %7 : vector<16x16xf32>
    %cst_29 = arith.constant dense<0xFF800000> : vector<16xf32>
    %93 = vector.multi_reduction <maximumf>, %92, %cst_29 [1] : vector<16x16xf32> to vector<16xf32>
    %94 = vector.shape_cast %93 : vector<16xf32> to vector<16x1xf32>
    %95 = vector.broadcast %94 : vector<16x1xf32> to vector<16x16xf32>
    %96 = arith.subf %92, %95 : vector<16x16xf32>
    %97 = math.exp %96 : vector<16x16xf32>
    %cst_30 = arith.constant dense<0.000000e+00> : vector<16xf32>
    %98 = vector.multi_reduction <add>, %97, %cst_30 [1] : vector<16x16xf32> to vector<16xf32>
    %99 = vector.shape_cast %98 : vector<16xf32> to vector<16x1xf32>
    %cst_31 = arith.constant dense<0.000000e+00> : vector<16x4xf32>
    %100 = tpu.matmul %97, %90, %cst_31 {dimension_numbers = #tpu.dot_dimension_numbers<[1], [0], [0], [1], [0, 0, 1, 1], [], []>} : vector<16x16xf32>, vector<16x4xf32>, vector<16x4xf32> -> vector<16x4xf32>
    %101 = tpu.reciprocal %99 : vector<16x1xf32> -> vector<16x1xf32>
    %102 = vector.broadcast %101 : vector<16x1xf32> to vector<16x4xf32>
    %103 = arith.mulf %100, %102 : vector<16x4xf32>
    %104 = vector.extract_strided_slice %6 {offsets = [0, 24], sizes = [16, 4], strides = [1, 1]} : vector<16x96xf32> to vector<16x4xf32>
    %105 = vector.extract_strided_slice %6 {offsets = [0, 56], sizes = [16, 4], strides = [1, 1]} : vector<16x96xf32> to vector<16x4xf32>
    %106 = vector.extract_strided_slice %6 {offsets = [0, 88], sizes = [16, 4], strides = [1, 1]} : vector<16x96xf32> to vector<16x4xf32>
    %cst_32 = arith.constant dense<0.000000e+00> : vector<16x16xf32>
    %107 = tpu.matmul %104, %105, %cst_32 {dimension_numbers = #tpu.dot_dimension_numbers<[1], [1], [0], [0], [0, 0, 1, 0], [], []>} : vector<16x4xf32>, vector<16x4xf32>, vector<16x16xf32> -> vector<16x16xf32>
    %108 = arith.addf %107, %7 : vector<16x16xf32>
    %cst_33 = arith.constant dense<0xFF800000> : vector<16xf32>
    %109 = vector.multi_reduction <maximumf>, %108, %cst_33 [1] : vector<16x16xf32> to vector<16xf32>
    %110 = vector.shape_cast %109 : vector<16xf32> to vector<16x1xf32>
    %111 = vector.broadcast %110 : vector<16x1xf32> to vector<16x16xf32>
    %112 = arith.subf %108, %111 : vector<16x16xf32>
    %113 = math.exp %112 : vector<16x16xf32>
    %cst_34 = arith.constant dense<0.000000e+00> : vector<16xf32>
    %114 = vector.multi_reduction <add>, %113, %cst_34 [1] : vector<16x16xf32> to vector<16xf32>
    %115 = vector.shape_cast %114 : vector<16xf32> to vector<16x1xf32>
    %cst_35 = arith.constant dense<0.000000e+00> : vector<16x4xf32>
    %116 = tpu.matmul %113, %106, %cst_35 {dimension_numbers = #tpu.dot_dimension_numbers<[1], [0], [0], [1], [0, 0, 1, 1], [], []>} : vector<16x16xf32>, vector<16x4xf32>, vector<16x4xf32> -> vector<16x4xf32>
    %117 = tpu.reciprocal %115 : vector<16x1xf32> -> vector<16x1xf32>
    %118 = vector.broadcast %117 : vector<16x1xf32> to vector<16x4xf32>
    %119 = arith.mulf %116, %118 : vector<16x4xf32>
    %120 = vector.extract_strided_slice %6 {offsets = [0, 28], sizes = [16, 4], strides = [1, 1]} : vector<16x96xf32> to vector<16x4xf32>
    %121 = vector.extract_strided_slice %6 {offsets = [0, 60], sizes = [16, 4], strides = [1, 1]} : vector<16x96xf32> to vector<16x4xf32>
    %122 = vector.extract_strided_slice %6 {offsets = [0, 92], sizes = [16, 4], strides = [1, 1]} : vector<16x96xf32> to vector<16x4xf32>
    %cst_36 = arith.constant dense<0.000000e+00> : vector<16x16xf32>
    %123 = tpu.matmul %120, %121, %cst_36 {dimension_numbers = #tpu.dot_dimension_numbers<[1], [1], [0], [0], [0, 0, 1, 0], [], []>} : vector<16x4xf32>, vector<16x4xf32>, vector<16x16xf32> -> vector<16x16xf32>
    %124 = arith.addf %123, %7 : vector<16x16xf32>
    %cst_37 = arith.constant dense<0xFF800000> : vector<16xf32>
    %125 = vector.multi_reduction <maximumf>, %124, %cst_37 [1] : vector<16x16xf32> to vector<16xf32>
    %126 = vector.shape_cast %125 : vector<16xf32> to vector<16x1xf32>
    %127 = vector.broadcast %126 : vector<16x1xf32> to vector<16x16xf32>
    %128 = arith.subf %124, %127 : vector<16x16xf32>
    %129 = math.exp %128 : vector<16x16xf32>
    %cst_38 = arith.constant dense<0.000000e+00> : vector<16xf32>
    %130 = vector.multi_reduction <add>, %129, %cst_38 [1] : vector<16x16xf32> to vector<16xf32>
    %131 = vector.shape_cast %130 : vector<16xf32> to vector<16x1xf32>
    %cst_39 = arith.constant dense<0.000000e+00> : vector<16x4xf32>
    %132 = tpu.matmul %129, %122, %cst_39 {dimension_numbers = #tpu.dot_dimension_numbers<[1], [0], [0], [1], [0, 0, 1, 1], [], []>} : vector<16x16xf32>, vector<16x4xf32>, vector<16x4xf32> -> vector<16x4xf32>
    %133 = tpu.reciprocal %131 : vector<16x1xf32> -> vector<16x1xf32>
    %134 = vector.broadcast %133 : vector<16x1xf32> to vector<16x4xf32>
    %135 = arith.mulf %132, %134 : vector<16x4xf32>
    %136 = tpu.concatenate %23, %39, %55, %71, %87, %103, %119, %135 in 1 : vector<16x4xf32>, vector<16x4xf32>, vector<16x4xf32>, vector<16x4xf32>, vector<16x4xf32>, vector<16x4xf32>, vector<16x4xf32>, vector<16x4xf32> -> vector<16x32xf32>
    %c0_40 = arith.constant 0 : index
    %c0_41 = arith.constant 0 : index
    %137 = vector.load %arg3[%c0_40, %c0_41] : memref<32x32xf32, #tpu.memory_space<vmem>>, vector<32x32xf32>
    %cst_42 = arith.constant dense<0.000000e+00> : vector<16x32xf32>
    %138 = tpu.matmul %136, %137, %cst_42 {dimension_numbers = #tpu.dot_dimension_numbers<[1], [0], [0], [1], [0, 0, 1, 1], [], []>} : vector<16x32xf32>, vector<32x32xf32>, vector<16x32xf32> -> vector<16x32xf32>
    %c0_43 = arith.constant 0 : index
    %c0_44 = arith.constant 0 : index
    %139 = vector.load %arg4[%c0_43, %c0_44] : memref<1x32xf32, #tpu.memory_space<vmem>>, vector<1x32xf32>
    %140 = vector.broadcast %139 : vector<1x32xf32> to vector<16x32xf32>
    %141 = arith.addf %138, %140 : vector<16x32xf32>
    %142 = vector.shape_cast %141 : vector<16x32xf32> to vector<2x8x32xf32>
    %c0_45 = arith.constant 0 : index
    %c0_46 = arith.constant 0 : index
    %c0_47 = arith.constant 0 : index
    %143 = vector.load %arg6[%c0_45, %c0_46, %c0_47] : memref<2x8x32xf32, #tpu.memory_space<vmem>>, vector<2x8x32xf32>
    tpu.vector_store %arg6[%c0_45, %c0_46, %c0_47], %142 {strides = array<i32>} : memref<2x8x32xf32, #tpu.memory_space<vmem>>, vector<2x8x32xf32>,
    return
  }
}

</mosaic_0001>

<llo_original>
// kernel: attention_forward.1
$region0: #{attention_forward.1}
  #allocation0 [shape = 'u32[]', space=smem, size = 0x4, offset = 0x4, fixed_abs, tag = 'smem constant byte address 0x4 - core index']
  #allocation1 [shape = 'u32[144,128]{1,0:T(1,128)}', space=vmem, size = 0x12000, scoped, tag = 'internal scratch']
  %s0 = inlined_call_operand.vmem [shape: f32[2,8,32], index: 0, kind: input, shape index: {}]
  %s1 = inlined_call_operand.vmem [shape: f32[32,96], index: 1, kind: input, shape index: {}]
  %s2 = inlined_call_operand.vmem [shape: f32[1,96], index: 2, kind: input, shape index: {}]
  %s3 = inlined_call_operand.vmem [shape: f32[32,32], index: 3, kind: input, shape index: {}]
  %s4 = inlined_call_operand.vmem [shape: f32[1,32], index: 4, kind: input, shape index: {}]
  %s5 = inlined_call_operand.vmem [shape: f32[16,16], index: 5, kind: input, shape index: {}]
  %s6 = inlined_call_operand.hbm [shape: f32[2,8,32], index: 6, kind: output, shape index: {}]
  %s7 = sld [smem:[#allocation0]]
  $region34: #{attention_forward.1} parent=0
    _
  %s9 = ssub.s32 1, %s7
  %s10 = scalar_select 0, %s9, %s7
  $region1: #{attention_forward.1} parent=0
    #allocation2 [shape = 'u8[8192]{0}', space=vmem, size = 0x2000, scoped, tag = 'output window, operand 0, single buffered']
    #allocation3 [shape = 's32[1]{0}', space=sflag, size = 0x4, scoped, tag = 'scoped memory for attention_forward.1']
    %11 = vsyncpa [#allocation3], 0
    // Predicated region
    $region2: #{attention_forward.1} parent=1 // pred_check
      _
    $region3: #{attention_forward.1} parent=1 // pred_check_branch
      %13 = sbr.rel (0) target = $region5
    $region4: #{attention_forward.1} parent=1 // pred_region
      _
    $region5: #{attention_forward.1} parent=1 // pred_fallthru
      _
    // Predicated region
    $region6: #{attention_forward.1} parent=1 // pred_check
      _
    $region7: #{attention_forward.1} parent=1 // pred_check_branch
      %15 = sbr.rel (0) target = $region9
    $region8: #{attention_forward.1} parent=1 // pred_region
      _
    $region9: #{attention_forward.1} parent=1 // pred_fallthru
      _
    // Predicated region
    $region10: #{attention_forward.1} parent=1 // pred_check
      _
    $region11: #{attention_forward.1} parent=1 // pred_check_branch
      %17 = sbr.rel (0) target = $region13
    $region12: #{attention_forward.1} parent=1 // pred_region
      _
    $region13: #{attention_forward.1} parent=1 // pred_fallthru
      _
    // Predicated region
    $region14: #{attention_forward.1} parent=1 // pred_check
      _
    $region15: #{attention_forward.1} parent=1 // pred_check_branch
      %19 = sbr.rel (0) target = $region17
    $region16: #{attention_forward.1} parent=1 // pred_region
      _
    $region17: #{attention_forward.1} parent=1 // pred_fallthru
      _
    // Predicated region
    $region18: #{attention_forward.1} parent=1 // pred_check
      _
    $region19: #{attention_forward.1} parent=1 // pred_check_branch
      %21 = sbr.rel (0) target = $region21
    $region20: #{attention_forward.1} parent=1 // pred_region
      _
    $region21: #{attention_forward.1} parent=1 // pred_fallthru
      _
    // Predicated region
    $region22: #{attention_forward.1} parent=1 // pred_check
      _
    $region23: #{attention_forward.1} parent=1 // pred_check_branch
      %23 = sbr.rel (0) target = $region25
    $region24: #{attention_forward.1} parent=1 // pred_region
      _
    $region25: #{attention_forward.1} parent=1 // pred_fallthru
      _
    %v24 = vld [vmem:[%s0] sm:$0xff]
    %v25 = vld [vmem:[%s0 + $0x8] sm:$0xff]
    %v26 = vld [vmem:[%s1] sm:$0xff]
    %v27 = vld [vmem:[%s1 + $0x8] sm:$0xff]
    %v28 = vld [vmem:[%s1 + $0x10] sm:$0xff]
    %v29 = vld [vmem:[%s1 + $0x18] sm:$0xff]
    %v30 = vld [vmem:[%s2] sm:$0x1]
    %v32 = vlaneseq
    %v33 = vshrl.u32 %v32, 7
    %v34 = vsub.s32 0, %v33
    %v35 = vrot.slane %v30, %v34
    %vm37 = vcmask 261120
    %v39 = vsel %vm37, %v24, 0
    %v42 = vsel %vm37, %v25, 0
    %44 = vmatprep.subr.mxu0 0.0
    %45 = vmatpush1.msra.mxu0 %v26
    %46 = vmatprep.subr.mxu0 0.0
    %47 = vmatpush1.msra.mxu0 %v27
    %48 = vmatprep.subr.mxu0 0.0
    %49 = vmatpush1.msra.mxu0 %v28
    %50 = vmatprep.subr.mxu0 0.0
    %51 = vmatpush1.msra.mxu0 %v29
    %52 = vmatprep.subr.mxu0 0.0
    %53 = vmatpush1.msra.mxu0 0.0
    %54 = vmatprep.subr.mxu0 0.0
    %55 = vmatpush1.msra.mxu0 0.0
    %56 = vmatprep.subr.mxu0 0.0
    %57 = vmatpush1.msra.mxu0 0.0
    %58 = vmatprep.subr.mxu0 0.0
    %59 = vmatpush1.msra.mxu0 0.0
    %60 = vmatprep.subr.mxu0 0.0
    %61 = vmatpush1.msra.mxu0 0.0
    %62 = vmatprep.subr.mxu0 0.0
    %63 = vmatpush1.msra.mxu0 0.0
    %64 = vmatprep.subr.mxu0 0.0
    %65 = vmatpush1.msra.mxu0 0.0
    %66 = vmatprep.subr.mxu0 0.0
    %67 = vmatpush1.msra.mxu0 0.0
    %68 = vmatprep.subr.mxu0 0.0
    %69 = vmatpush1.msra.mxu0 0.0
    %70 = vmatprep.subr.mxu0 0.0
    %71 = vmatpush1.msra.mxu0 0.0
    %72 = vmatprep.subr.mxu0 0.0
    %73 = vmatpush1.msra.mxu0 0.0
    %74 = vmatprep.subr.mxu0 0.0
    %75 = vmatpush1.msra.mxu0 0.0
    %76 = vmatprep.subr.mxu0 0.0
    %77 = vmatpush1.msra.mxu0 0.0
    %78 = vmatprep.subr.mxu0 0.0
    %79 = vmatpush1.msra.mxu0 0.0
    %80 = vmatprep.subr.mxu0 0.0
    %81 = vmatpush1.msra.mxu0 0.0
    %82 = vmatprep.subr.mxu0 0.0
    %83 = vmatpush1.msra.mxu0 0.0
    %84 = vmatprep.subr.mxu0 0.0
    %85 = vmatpush1.msra.mxu0 0.0
    %86 = vmatprep.subr.mxu0 0.0
    %87 = vmatpush1.msra.mxu0 0.0
    %88 = vmatprep.subr.mxu0 0.0
    %89 = vmatpush1.msra.mxu0 0.0
    %90 = vmatprep.subr.mxu0 0.0
    %91 = vmatpush1.msra.mxu0 0.0
    %92 = vmatprep.subr.mxu0 0.0
    %93 = vmatpush1.msra.mxu0 0.0
    %94 = vmatprep.subr.mxu0 0.0
    %95 = vmatpush1.msra.mxu0 0.0
    %96 = vmatprep.subr.mxu0 0.0
    %97 = vmatpush1.msra.mxu0 0.0
    %98 = vmatprep.subr.mxu0 0.0
    %99 = vmatpush1.msra.mxu0 0.0
    %100 = vmatprep.subr.mxu0 0.0
    %101 = vmatpush1.msra.mxu0 0.0
    %102 = vmatprep.subr.mxu0 0.0
    %103 = vmatpush1.msra.mxu0 0.0
    %104 = vmatprep.subr.mxu0 0.0
    %105 = vmatpush1.msra.mxu0 0.0
    %106 = vmatprep.subr.mxu0 0.0
    %107 = vmatpush1.msra.mxu0 0.0
    %108 = vmatprep.mubr.f32.mxu0 0.0
    %109 = vmatmul.mubr.f32.gmra.mrb[0].mxu0 %v39
    %v110 = vpop.f32.mrb[0].mxu0
    %v111 = vadd.f32 %v35, %v110
    %v112 = vpop.f32.mrb[0].mxu0
    %113 = vmatprep.mubr.f32.mxu0 0.0
    %114 = vmatmul.mubr.f32.gmra.mrb[0].mxu0 %v42
    %v115 = vpop.f32.mrb[0].mxu0
    %v116 = vadd.f32 %v35, %v115
    %v117 = vpop.f32.mrb[0].mxu0
    %118 = vdwg.mxu0
    %v119 = vld [vmem:[%s5] sm:$0xff]
    %v120 = vld [vmem:[%s5 + $0x8] sm:$0xff]
    %123 = vrot.lane.b32.xlu0 %v111, 96
    %v124 = vpop.permute.xlu0 %123
    %125 = vrot.lane.b32.xlu0 %v116, 96
    %v126 = vpop.permute.xlu0 %125
    %vm127 = vcmask 31744
    %v128 = vsel %vm127, %v111, 0
    %v130 = vsel %vm127, %v116, 0
    %v132 = vsel %vm127, %v124, 0
    %v134 = vsel %vm127, %v126, 0
    %136 = vmatprep.subr.mxu0 0.0
    %137 = vmatpush1.xpose.msra.mxu0 %v132
    %138 = vmatprep.subr.mxu0 0.0
    %139 = vmatpush1.xpose.msra.mxu0 %v134
    %140 = vmatprep.subr.mxu0 0.0
    %141 = vmatpush1.xpose.msra.mxu0 0.0
    %142 = vmatprep.subr.mxu0 0.0
    %143 = vmatpush1.xpose.msra.mxu0 0.0
    %144 = vmatprep.subr.mxu0 0.0
    %145 = vmatpush1.xpose.msra.mxu0 0.0
    %146 = vmatprep.subr.mxu0 0.0
    %147 = vmatpush1.xpose.msra.mxu0 0.0
    %148 = vmatprep.subr.mxu0 0.0
    %149 = vmatpush1.xpose.msra.mxu0 0.0
    %150 = vmatprep.subr.mxu0 0.0
    %151 = vmatpush1.xpose.msra.mxu0 0.0
    %152 = vmatprep.subr.mxu0 0.0
    %153 = vmatpush1.xpose.msra.mxu0 0.0
    %154 = vmatprep.subr.mxu0 0.0
    %155 = vmatpush1.xpose.msra.mxu0 0.0
    %156 = vmatprep.subr.mxu0 0.0
    %157 = vmatpush1.xpose.msra.mxu0 0.0
    %158 = vmatprep.subr.mxu0 0.0
    %159 = vmatpush1.xpose.msra.mxu0 0.0
    %160 = vmatprep.subr.mxu0 0.0
    %161 = vmatpush1.xpose.msra.mxu0 0.0
    %162 = vmatprep.subr.mxu0 0.0
    %163 = vmatpush1.xpose.msra.mxu0 0.0
    %164 = vmatprep.subr.mxu0 0.0
    %165 = vmatpush1.xpose.msra.mxu0 0.0
    %166 = vmatprep.subr.mxu0 0.0
    %167 = vmatpush1.xpose.msra.mxu0 0.0
    %168 = vmatprep.subr.mxu0 0.0
    %169 = vmatpush1.xpose.msra.mxu0 0.0
    %170 = vmatprep.subr.mxu0 0.0
    %171 = vmatpush1.xpose.msra.mxu0 0.0
    %172 = vmatprep.subr.mxu0 0.0
    %173 = vmatpush1.xpose.msra.mxu0 0.0
    %174 = vmatprep.subr.mxu0 0.0
    %175 = vmatpush1.xpose.msra.mxu0 0.0
    %176 = vmatprep.subr.mxu0 0.0
    %177 = vmatpush1.xpose.msra.mxu0 0.0
    %178 = vmatprep.subr.mxu0 0.0
    %179 = vmatpush1.xpose.msra.mxu0 0.0
    %180 = vmatprep.subr.mxu0 0.0
    %181 = vmatpush1.xpose.msra.mxu0 0.0
    %182 = vmatprep.subr.mxu0 0.0
    %183 = vmatpush1.xpose.msra.mxu0 0.0
    %184 = vmatprep.subr.mxu0 0.0
    %185 = vmatpush1.xpose.msra.mxu0 0.0
    %186 = vmatprep.subr.mxu0 0.0
    %187 = vmatpush1.xpose.msra.mxu0 0.0
    %188 = vmatprep.subr.mxu0 0.0
    %189 = vmatpush1.xpose.msra.mxu0 0.0
    %190 = vmatprep.subr.mxu0 0.0
    %191 = vmatpush1.xpose.msra.mxu0 0.0
    %192 = vmatprep.subr.mxu0 0.0
    %193 = vmatpush1.xpose.msra.mxu0 0.0
    %194 = vmatprep.subr.mxu0 0.0
    %195 = vmatpush1.xpose.msra.mxu0 0.0
    %196 = vmatprep.subr.mxu0 0.0
    %197 = vmatpush1.xpose.msra.mxu0 0.0
    %198 = vmatprep.subr.mxu0 0.0
    %199 = vmatpush1.xpose.msra.mxu0 0.0
    %200 = vmatprep.mubr.f32.mxu0 0.0
    %201 = vmatmul.mubr.f32.gmra.mrb[0].mxu0 %v128
    %v202 = vpop.f32.mrb[0].mxu0
    %v203 = vadd.f32 %v119, %v202
    %v204 = vpop.f32.mrb[0].mxu0
    %205 = vmatprep.mubr.f32.mxu0 0.0
    %206 = vmatmul.mubr.f32.gmra.mrb[0].mxu0 %v130
    %v207 = vpop.f32.mrb[0].mxu0
    %v208 = vadd.f32 %v120, %v207
    %v209 = vpop.f32.mrb[0].mxu0
    %210 = vdwg.mxu0
    %vm211 = vcmask 130048
    %v212 = vsel %vm211, %v203, -inf
    %213 = vmax.xlane.f32.xlu0 %v212
    %v214 = vpop.xlane.xlu0 %213
    %v215 = vsel %vm211, %v208, -inf
    %216 = vmax.xlane.f32.xlu0 %v215
    %v217 = vpop.xlane.xlu0 %216
    %v218 = vsub.f32 %v203, %v214
    %v219 = vsub.f32 %v208, %v217
    %v220 = vmul.f32 %v218, 1.442695
    %v221 = vpow.pop %v220
    %v222 = vmul.f32 %v219, 1.442695
    %v223 = vpow.pop %v222
    %v224 = vsel %vm211, %v221, 0.0
    %225 = vadd.xlane.f32.xlu0 %v224
    %v226 = vpop.xlane.xlu0 %225
    %v227 = vsel %vm211, %v223, 0.0
    %228 = vadd.xlane.f32.xlu0 %v227
    %v229 = vpop.xlane.xlu0 %228
    %230 = vrot.lane.b32.xlu0 %v111, 64
    %v231 = vpop.permute.xlu0 %230
    %232 = vrot.lane.b32.xlu0 %v116, 64
    %v233 = vpop.permute.xlu0 %232
    %v237 = vsel %vm211, %v221, 0
    %v240 = vsel %vm211, %v223, 0
    %242 = vmatprep.subr.mxu0 0.0
    %243 = vmatpush1.msra.mxu0 %v231
    %244 = vmatprep.subr.mxu0 0.0
    %245 = vmatpush1.msra.mxu0 %v233
    %246 = vmatprep.subr.mxu0 0.0
    %247 = vmatpush1.msra.mxu0 0.0
    %248 = vmatprep.subr.mxu0 0.0
    %249 = vmatpush1.msra.mxu0 0.0
    %250 = vmatprep.subr.mxu0 0.0
    %251 = vmatpush1.msra.mxu0 0.0
    %252 = vmatprep.subr.mxu0 0.0
    %253 = vmatpush1.msra.mxu0 0.0
    %254 = vmatprep.subr.mxu0 0.0
    %255 = vmatpush1.msra.mxu0 0.0
    %256 = vmatprep.subr.mxu0 0.0
    %257 = vmatpush1.msra.mxu0 0.0
    %258 = vmatprep.subr.mxu0 0.0
    %259 = vmatpush1.msra.mxu0 0.0
    %260 = vmatprep.subr.mxu0 0.0
    %261 = vmatpush1.msra.mxu0 0.0
    %262 = vmatprep.subr.mxu0 0.0
    %263 = vmatpush1.msra.mxu0 0.0
    %264 = vmatprep.subr.mxu0 0.0
    %265 = vmatpush1.msra.mxu0 0.0
    %266 = vmatprep.subr.mxu0 0.0
    %267 = vmatpush1.msra.mxu0 0.0
    %268 = vmatprep.subr.mxu0 0.0
    %269 = vmatpush1.msra.mxu0 0.0
    %270 = vmatprep.subr.mxu0 0.0
    %271 = vmatpush1.msra.mxu0 0.0
    %272 = vmatprep.subr.mxu0 0.0
    %273 = vmatpush1.msra.mxu0 0.0
    %274 = vmatprep.subr.mxu0 0.0
    %275 = vmatpush1.msra.mxu0 0.0
    %276 = vmatprep.subr.mxu0 0.0
    %277 = vmatpush1.msra.mxu0 0.0
    %278 = vmatprep.subr.mxu0 0.0
    %279 = vmatpush1.msra.mxu0 0.0
    %280 = vmatprep.subr.mxu0 0.0
    %281 = vmatpush1.msra.mxu0 0.0
    %282 = vmatprep.subr.mxu0 0.0
    %283 = vmatpush1.msra.mxu0 0.0
    %284 = vmatprep.subr.mxu0 0.0
    %285 = vmatpush1.msra.mxu0 0.0
    %286 = vmatprep.subr.mxu0 0.0
    %287 = vmatpush1.msra.mxu0 0.0
    %288 = vmatprep.subr.mxu0 0.0
    %289 = vmatpush1.msra.mxu0 0.0
    %290 = vmatprep.subr.mxu0 0.0
    %291 = vmatpush1.msra.mxu0 0.0
    %292 = vmatprep.subr.mxu0 0.0
    %293 = vmatpush1.msra.mxu0 0.0
    %294 = vmatprep.subr.mxu0 0.0
    %295 = vmatpush1.msra.mxu0 0.0
    %296 = vmatprep.subr.mxu0 0.0
    %297 = vmatpush1.msra.mxu0 0.0
    %298 = vmatprep.subr.mxu0 0.0
    %299 = vmatpush1.msra.mxu0 0.0
    %300 = vmatprep.subr.mxu0 0.0
    %301 = vmatpush1.msra.mxu0 0.0
    %302 = vmatprep.subr.mxu0 0.0
    %303 = vmatpush1.msra.mxu0 0.0
    %304 = vmatprep.subr.mxu0 0.0
    %305 = vmatpush1.msra.mxu0 0.0
    %306 = vmatprep.mubr.f32.mxu0 0.0
    %307 = vmatmul.mubr.f32.gmra.mrb[0].mxu0 %v237
    %v308 = vpop.f32.mrb[0].mxu0
    %v309 = vadd.f32 0.0, %v308
    %v310 = vpop.f32.mrb[0].mxu0
    %311 = vmatprep.mubr.f32.mxu0 0.0
    %312 = vmatmul.mubr.f32.gmra.mrb[0].mxu0 %v240
    %v313 = vpop.f32.mrb[0].mxu0
    %v314 = vadd.f32 0.0, %v313
    %v315 = vpop.f32.mrb[0].mxu0
    %316 = vdwg.mxu0
    %v317 = vrcp.pop %v226
    %v318 = vrcp.pop %v229
    %v319 = vmul.f32 %v309, %v317
    %v320 = vmul.f32 %v314, %v318
    %321 = vrot.lane.b32.xlu0 %v111, 124
    %v322 = vpop.permute.xlu0 %321
    %323 = vrot.lane.b32.xlu0 %v116, 124
    %v324 = vpop.permute.xlu0 %323
    %325 = vrot.lane.b32.xlu0 %v111, 92
    %v326 = vpop.permute.xlu0 %325
    %327 = vrot.lane.b32.xlu0 %v116, 92
    %v328 = vpop.permute.xlu0 %327
    %v329 = vsel %vm127, %v322, 0
    %v331 = vsel %vm127, %v324, 0
    %v333 = vsel %vm127, %v326, 0
    %v335 = vsel %vm127, %v328, 0
    %337 = vmatprep.subr.mxu0 0.0
    %338 = vmatpush1.xpose.msra.mxu0 %v333
    %339 = vmatprep.subr.mxu0 0.0
    %340 = vmatpush1.xpose.msra.mxu0 %v335
    %341 = vmatprep.subr.mxu0 0.0
    %342 = vmatpush1.xpose.msra.mxu0 0.0
    %343 = vmatprep.subr.mxu0 0.0
    %344 = vmatpush1.xpose.msra.mxu0 0.0
    %345 = vmatprep.subr.mxu0 0.0
    %346 = vmatpush1.xpose.msra.mxu0 0.0
    %347 = vmatprep.subr.mxu0 0.0
    %348 = vmatpush1.xpose.msra.mxu0 0.0
    %349 = vmatprep.subr.mxu0 0.0
    %350 = vmatpush1.xpose.msra.mxu0 0.0
    %351 = vmatprep.subr.mxu0 0.0
    %352 = vmatpush1.xpose.msra.mxu0 0.0
    %353 = vmatprep.subr.mxu0 0.0
    %354 = vmatpush1.xpose.msra.mxu0 0.0
    %355 = vmatprep.subr.mxu0 0.0
    %356 = vmatpush1.xpose.msra.mxu0 0.0
    %357 = vmatprep.subr.mxu0 0.0
    %358 = vmatpush1.xpose.msra.mxu0 0.0
    %359 = vmatprep.subr.mxu0 0.0
    %360 = vmatpush1.xpose.msra.mxu0 0.0
    %361 = vmatprep.subr.mxu0 0.0
    %362 = vmatpush1.xpose.msra.mxu0 0.0
    %363 = vmatprep.subr.mxu0 0.0
    %364 = vmatpush1.xpose.msra.mxu0 0.0
    %365 = vmatprep.subr.mxu0 0.0
    %366 = vmatpush1.xpose.msra.mxu0 0.0
    %367 = vmatprep.subr.mxu0 0.0
    %368 = vmatpush1.xpose.msra.mxu0 0.0
    %369 = vmatprep.subr.mxu0 0.0
    %370 = vmatpush1.xpose.msra.mxu0 0.0
    %371 = vmatprep.subr.mxu0 0.0
    %372 = vmatpush1.xpose.msra.mxu0 0.0
    %373 = vmatprep.subr.mxu0 0.0
    %374 = vmatpush1.xpose.msra.mxu0 0.0
    %375 = vmatprep.subr.mxu0 0.0
    %376 = vmatpush1.xpose.msra.mxu0 0.0
    %377 = vmatprep.subr.mxu0 0.0
    %378 = vmatpush1.xpose.msra.mxu0 0.0
    %379 = vmatprep.subr.mxu0 0.0
    %380 = vmatpush1.xpose.msra.mxu0 0.0
    %381 = vmatprep.subr.mxu0 0.0
    %382 = vmatpush1.xpose.msra.mxu0 0.0
    %383 = vmatprep.subr.mxu0 0.0
    %384 = vmatpush1.xpose.msra.mxu0 0.0
    %385 = vmatprep.subr.mxu0 0.0
    %386 = vmatpush1.xpose.msra.mxu0 0.0
    %387 = vmatprep.subr.mxu0 0.0
    %388 = vmatpush1.xpose.msra.mxu0 0.0
    %389 = vmatprep.subr.mxu0 0.0
    %390 = vmatpush1.xpose.msra.mxu0 0.0
    %391 = vmatprep.subr.mxu0 0.0
    %392 = vmatpush1.xpose.msra.mxu0 0.0
    %393 = vmatprep.subr.mxu0 0.0
    %394 = vmatpush1.xpose.msra.mxu0 0.0
    %395 = vmatprep.subr.mxu0 0.0
    %396 = vmatpush1.xpose.msra.mxu0 0.0
    %397 = vmatprep.subr.mxu0 0.0
    %398 = vmatpush1.xpose.msra.mxu0 0.0
    %399 = vmatprep.subr.mxu0 0.0
    %400 = vmatpush1.xpose.msra.mxu0 0.0
    %401 = vmatprep.mubr.f32.mxu0 0.0
    %402 = vmatmul.mubr.f32.gmra.mrb[0].mxu0 %v329
    %v403 = vpop.f32.mrb[0].mxu0
    %v404 = vadd.f32 %v119, %v403
    %v405 = vpop.f32.mrb[0].mxu0
    %406 = vmatprep.mubr.f32.mxu0 0.0
    %407 = vmatmul.mubr.f32.gmra.mrb[0].mxu0 %v331
    %v408 = vpop.f32.mrb[0].mxu0
    %v409 = vadd.f32 %v120, %v408
    %v410 = vpop.f32.mrb[0].mxu0
    %411 = vdwg.mxu0
    %v412 = vsel %vm211, %v404, -inf
    %413 = vmax.xlane.f32.xlu0 %v412
    %v414 = vpop.xlane.xlu0 %413
    %v415 = vsel %vm211, %v409, -inf
    %416 = vmax.xlane.f32.xlu0 %v415
    %v417 = vpop.xlane.xlu0 %416
    %v418 = vsub.f32 %v404, %v414
    %v419 = vsub.f32 %v409, %v417
    %v420 = vmul.f32 %v418, 1.442695
    %v421 = vpow.pop %v420
    %v422 = vmul.f32 %v419, 1.442695
    %v423 = vpow.pop %v422
    %v424 = vsel %vm211, %v421, 0.0
    %425 = vadd.xlane.f32.xlu0 %v424
    %v426 = vpop.xlane.xlu0 %425
    %v427 = vsel %vm211, %v423, 0.0
    %428 = vadd.xlane.f32.xlu0 %v427
    %v429 = vpop.xlane.xlu0 %428
    %430 = vrot.lane.b32.xlu0 %v111, 60
    %v431 = vpop.permute.xlu0 %430
    %432 = vrot.lane.b32.xlu0 %v116, 60
    %v433 = vpop.permute.xlu0 %432
    %v437 = vsel %vm211, %v421, 0
    %v440 = vsel %vm211, %v423, 0
    %442 = vmatprep.subr.mxu0 0.0
    %443 = vmatpush1.msra.mxu0 %v431
    %444 = vmatprep.subr.mxu0 0.0
    %445 = vmatpush1.msra.mxu0 %v433
    %446 = vmatprep.subr.mxu0 0.0
    %447 = vmatpush1.msra.mxu0 0.0
    %448 = vmatprep.subr.mxu0 0.0
    %449 = vmatpush1.msra.mxu0 0.0
    %450 = vmatprep.subr.mxu0 0.0
    %451 = vmatpush1.msra.mxu0 0.0
    %452 = vmatprep.subr.mxu0 0.0
    %453 = vmatpush1.msra.mxu0 0.0
    %454 = vmatprep.subr.mxu0 0.0
    %455 = vmatpush1.msra.mxu0 0.0
    %456 = vmatprep.subr.mxu0 0.0
    %457 = vmatpush1.msra.mxu0 0.0
    %458 = vmatprep.subr.mxu0 0.0
    %459 = vmatpush1.msra.mxu0 0.0
    %460 = vmatprep.subr.mxu0 0.0
    %461 = vmatpush1.msra.mxu0 0.0
    %462 = vmatprep.subr.mxu0 0.0
    %463 = vmatpush1.msra.mxu0 0.0
    %464 = vmatprep.subr.mxu0 0.0
    %465 = vmatpush1.msra.mxu0 0.0
    %466 = vmatprep.subr.mxu0 0.0
    %467 = vmatpush1.msra.mxu0 0.0
    %468 = vmatprep.subr.mxu0 0.0
    %469 = vmatpush1.msra.mxu0 0.0
    %470 = vmatprep.subr.mxu0 0.0
    %471 = vmatpush1.msra.mxu0 0.0
    %472 = vmatprep.subr.mxu0 0.0
    %473 = vmatpush1.msra.mxu0 0.0
    %474 = vmatprep.subr.mxu0 0.0
    %475 = vmatpush1.msra.mxu0 0.0
    %476 = vmatprep.subr.mxu0 0.0
    %477 = vmatpush1.msra.mxu0 0.0
    %478 = vmatprep.subr.mxu0 0.0
    %479 = vmatpush1.msra.mxu0 0.0
    %480 = vmatprep.subr.mxu0 0.0
    %481 = vmatpush1.msra.mxu0 0.0
    %482 = vmatprep.subr.mxu0 0.0
    %483 = vmatpush1.msra.mxu0 0.0
    %484 = vmatprep.subr.mxu0 0.0
    %485 = vmatpush1.msra.mxu0 0.0
    %486 = vmatprep.subr.mxu0 0.0
    %487 = vmatpush1.msra.mxu0 0.0
    %488 = vmatprep.subr.mxu0 0.0
    %489 = vmatpush1.msra.mxu0 0.0
    %490 = vmatprep.subr.mxu0 0.0
    %491 = vmatpush1.msra.mxu0 0.0
    %492 = vmatprep.subr.mxu0 0.0
    %493 = vmatpush1.msra.mxu0 0.0
    %494 = vmatprep.subr.mxu0 0.0
    %495 = vmatpush1.msra.mxu0 0.0
    %496 = vmatprep.subr.mxu0 0.0
    %497 = vmatpush1.msra.mxu0 0.0
    %498 = vmatprep.subr.mxu0 0.0
    %499 = vmatpush1.msra.mxu0 0.0
    %500 = vmatprep.subr.mxu0 0.0
    %501 = vmatpush1.msra.mxu0 0.0
    %502 = vmatprep.subr.mxu0 0.0
    %503 = vmatpush1.msra.mxu0 0.0
    %504 = vmatprep.subr.mxu0 0.0
    %505 = vmatpush1.msra.mxu0 0.0
    %506 = vmatprep.mubr.f32.mxu0 0.0
    %507 = vmatmul.mubr.f32.gmra.mrb[0].mxu0 %v437
    %v508 = vpop.f32.mrb[0].mxu0
    %v509 = vadd.f32 0.0, %v508
    %v510 = vpop.f32.mrb[0].mxu0
    %511 = vmatprep.mubr.f32.mxu0 0.0
    %512 = vmatmul.mubr.f32.gmra.mrb[0].mxu0 %v440
    %v513 = vpop.f32.mrb[0].mxu0
    %v514 = vadd.f32 0.0, %v513
    %v515 = vpop.f32.mrb[0].mxu0
    %516 = vdwg.mxu0
    %v517 = vrcp.pop %v426
    %v518 = vrcp.pop %v429
    %v519 = vmul.f32 %v509, %v517
    %v520 = vmul.f32 %v514, %v518
    %521 = vrot.lane.b32.xlu0 %v111, 120
    %v522 = vpop.permute.xlu0 %521
    %523 = vrot.lane.b32.xlu0 %v116, 120
    %v524 = vpop.permute.xlu0 %523
    %525 = vrot.lane.b32.xlu0 %v111, 88
    %v526 = vpop.permute.xlu0 %525
    %527 = vrot.lane.b32.xlu0 %v116, 88
    %v528 = vpop.permute.xlu0 %527
    %v529 = vsel %vm127, %v522, 0
    %v531 = vsel %vm127, %v524, 0
    %v533 = vsel %vm127, %v526, 0
    %v535 = vsel %vm127, %v528, 0
    %537 = vmatprep.subr.mxu0 0.0
    %538 = vmatpush1.xpose.msra.mxu0 %v533
    %539 = vmatprep.subr.mxu0 0.0
    %540 = vmatpush1.xpose.msra.mxu0 %v535
    %541 = vmatprep.subr.mxu0 0.0
    %542 = vmatpush1.xpose.msra.mxu0 0.0
    %543 = vmatprep.subr.mxu0 0.0
    %544 = vmatpush1.xpose.msra.mxu0 0.0
    %545 = vmatprep.subr.mxu0 0.0
    %546 = vmatpush1.xpose.msra.mxu0 0.0
    %547 = vmatprep.subr.mxu0 0.0
    %548 = vmatpush1.xpose.msra.mxu0 0.0
    %549 = vmatprep.subr.mxu0 0.0
    %550 = vmatpush1.xpose.msra.mxu0 0.0
    %551 = vmatprep.subr.mxu0 0.0
    %552 = vmatpush1.xpose.msra.mxu0 0.0
    %553 = vmatprep.subr.mxu0 0.0
    %554 = vmatpush1.xpose.msra.mxu0 0.0
    %555 = vmatprep.subr.mxu0 0.0
    %556 = vmatpush1.xpose.msra.mxu0 0.0
    %557 = vmatprep.subr.mxu0 0.0
    %558 = vmatpush1.xpose.msra.mxu0 0.0
    %559 = vmatprep.subr.mxu0 0.0
    %560 = vmatpush1.xpose.msra.mxu0 0.0
    %561 = vmatprep.subr.mxu0 0.0
    %562 = vmatpush1.xpose.msra.mxu0 0.0
    %563 = vmatprep.subr.mxu0 0.0
    %564 = vmatpush1.xpose.msra.mxu0 0.0
    %565 = vmatprep.subr.mxu0 0.0
    %566 = vmatpush1.xpose.msra.mxu0 0.0
    %567 = vmatprep.subr.mxu0 0.0
    %568 = vmatpush1.xpose.msra.mxu0 0.0
    %569 = vmatprep.subr.mxu0 0.0
    %570 = vmatpush1.xpose.msra.mxu0 0.0
    %571 = vmatprep.subr.mxu0 0.0
    %572 = vmatpush1.xpose.msra.mxu0 0.0
    %573 = vmatprep.subr.mxu0 0.0
    %574 = vmatpush1.xpose.msra.mxu0 0.0
    %575 = vmatprep.subr.mxu0 0.0
    %576 = vmatpush1.xpose.msra.mxu0 0.0
    %577 = vmatprep.subr.mxu0 0.0
    %578 = vmatpush1.xpose.msra.mxu0 0.0
    %579 = vmatprep.subr.mxu0 0.0
    %580 = vmatpush1.xpose.msra.mxu0 0.0
    %581 = vmatprep.subr.mxu0 0.0
    %582 = vmatpush1.xpose.msra.mxu0 0.0
    %583 = vmatprep.subr.mxu0 0.0
    %584 = vmatpush1.xpose.msra.mxu0 0.0
    %585 = vmatprep.subr.mxu0 0.0
    %586 = vmatpush1.xpose.msra.mxu0 0.0
    %587 = vmatprep.subr.mxu0 0.0
    %588 = vmatpush1.xpose.msra.mxu0 0.0
    %589 = vmatprep.subr.mxu0 0.0
    %590 = vmatpush1.xpose.msra.mxu0 0.0
    %591 = vmatprep.subr.mxu0 0.0
    %592 = vmatpush1.xpose.msra.mxu0 0.0
    %593 = vmatprep.subr.mxu0 0.0
    %594 = vmatpush1.xpose.msra.mxu0 0.0
    %595 = vmatprep.subr.mxu0 0.0
    %596 = vmatpush1.xpose.msra.mxu0 0.0
    %597 = vmatprep.subr.mxu0 0.0
    %598 = vmatpush1.xpose.msra.mxu0 0.0
    %599 = vmatprep.subr.mxu0 0.0
    %600 = vmatpush1.xpose.msra.mxu0 0.0
    %601 = vmatprep.mubr.f32.mxu0 0.0
    %602 = vmatmul.mubr.f32.gmra.mrb[0].mxu0 %v529
    %v603 = vpop.f32.mrb[0].mxu0
    %v604 = vadd.f32 %v119, %v603
    %v605 = vpop.f32.mrb[0].mxu0
    %606 = vmatprep.mubr.f32.mxu0 0.0
    %607 = vmatmul.mubr.f32.gmra.mrb[0].mxu0 %v531
    %v608 = vpop.f32.mrb[0].mxu0
    %v609 = vadd.f32 %v120, %v608
    %v610 = vpop.f32.mrb[0].mxu0
    %611 = vdwg.mxu0
    %v612 = vsel %vm211, %v604, -inf
    %613 = vmax.xlane.f32.xlu0 %v612
    %v614 = vpop.xlane.xlu0 %613
    %v615 = vsel %vm211, %v609, -inf
    %616 = vmax.xlane.f32.xlu0 %v615
    %v617 = vpop.xlane.xlu0 %616
    %v618 = vsub.f32 %v604, %v614
    %v619 = vsub.f32 %v609, %v617
    %v620 = vmul.f32 %v618, 1.442695
    %v621 = vpow.pop %v620
    %v622 = vmul.f32 %v619, 1.442695
    %v623 = vpow.pop %v622
    %v624 = vsel %vm211, %v621, 0.0
    %625 = vadd.xlane.f32.xlu0 %v624
    %v626 = vpop.xlane.xlu0 %625
    %v627 = vsel %vm211, %v623, 0.0
    %628 = vadd.xlane.f32.xlu0 %v627
    %v629 = vpop.xlane.xlu0 %628
    %630 = vrot.lane.b32.xlu0 %v111, 56
    %v631 = vpop.permute.xlu0 %630
    %632 = vrot.lane.b32.xlu0 %v116, 56
    %v633 = vpop.permute.xlu0 %632
    %v637 = vsel %vm211, %v621, 0
    %v640 = vsel %vm211, %v623, 0
    %642 = vmatprep.subr.mxu0 0.0
    %643 = vmatpush1.msra.mxu0 %v631
    %644 = vmatprep.subr.mxu0 0.0
    %645 = vmatpush1.msra.mxu0 %v633
    %646 = vmatprep.subr.mxu0 0.0
    %647 = vmatpush1.msra.mxu0 0.0
    %648 = vmatprep.subr.mxu0 0.0
    %649 = vmatpush1.msra.mxu0 0.0
    %650 = vmatprep.subr.mxu0 0.0
    %651 = vmatpush1.msra.mxu0 0.0
    %652 = vmatprep.subr.mxu0 0.0
    %653 = vmatpush1.msra.mxu0 0.0
    %654 = vmatprep.subr.mxu0 0.0
    %655 = vmatpush1.msra.mxu0 0.0
    %656 = vmatprep.subr.mxu0 0.0
    %657 = vmatpush1.msra.mxu0 0.0
    %658 = vmatprep.subr.mxu0 0.0
    %659 = vmatpush1.msra.mxu0 0.0
    %660 = vmatprep.subr.mxu0 0.0
    %661 = vmatpush1.msra.mxu0 0.0
    %662 = vmatprep.subr.mxu0 0.0
    %663 = vmatpush1.msra.mxu0 0.0
    %664 = vmatprep.subr.mxu0 0.0
    %665 = vmatpush1.msra.mxu0 0.0
    %666 = vmatprep.subr.mxu0 0.0
    %667 = vmatpush1.msra.mxu0 0.0
    %668 = vmatprep.subr.mxu0 0.0
    %669 = vmatpush1.msra.mxu0 0.0
    %670 = vmatprep.subr.mxu0 0.0
    %671 = vmatpush1.msra.mxu0 0.0
    %672 = vmatprep.subr.mxu0 0.0
    %673 = vmatpush1.msra.mxu0 0.0
    %674 = vmatprep.subr.mxu0 0.0
    %675 = vmatpush1.msra.mxu0 0.0
    %676 = vmatprep.subr.mxu0 0.0
    %677 = vmatpush1.msra.mxu0 0.0
    %678 = vmatprep.subr.mxu0 0.0
    %679 = vmatpush1.msra.mxu0 0.0
    %680 = vmatprep.subr.mxu0 0.0
    %681 = vmatpush1.msra.mxu0 0.0
    %682 = vmatprep.subr.mxu0 0.0
    %683 = vmatpush1.msra.mxu0 0.0
    %684 = vmatprep.subr.mxu0 0.0
    %685 = vmatpush1.msra.mxu0 0.0
    %686 = vmatprep.subr.mxu0 0.0
    %687 = vmatpush1.msra.mxu0 0.0
    %688 = vmatprep.subr.mxu0 0.0
    %689 = vmatpush1.msra.mxu0 0.0
    %690 = vmatprep.subr.mxu0 0.0
    %691 = vmatpush1.msra.mxu0 0.0
    %692 = vmatprep.subr.mxu0 0.0
    %693 = vmatpush1.msra.mxu0 0.0
    %694 = vmatprep.subr.mxu0 0.0
    %695 = vmatpush1.msra.mxu0 0.0
    %696 = vmatprep.subr.mxu0 0.0
    %697 = vmatpush1.msra.mxu0 0.0
    %698 = vmatprep.subr.mxu0 0.0
    %699 = vmatpush1.msra.mxu0 0.0
    %700 = vmatprep.subr.mxu0 0.0
    %701 = vmatpush1.msra.mxu0 0.0
    %702 = vmatprep.subr.mxu0 0.0
    %703 = vmatpush1.msra.mxu0 0.0
    %704 = vmatprep.subr.mxu0 0.0
    %705 = vmatpush1.msra.mxu0 0.0
    %706 = vmatprep.mubr.f32.mxu0 0.0
    %707 = vmatmul.mubr.f32.gmra.mrb[0].mxu0 %v637
    %v708 = vpop.f32.mrb[0].mxu0
    %v709 = vadd.f32 0.0, %v708
    %v710 = vpop.f32.mrb[0].mxu0
    %711 = vmatprep.mubr.f32.mxu0 0.0
    %712 = vmatmul.mubr.f32.gmra.mrb[0].mxu0 %v640
    %v713 = vpop.f32.mrb[0].mxu0
    %v714 = vadd.f32 0.0, %v713
    %v715 = vpop.f32.mrb[0].mxu0
    %716 = vdwg.mxu0
    %v717 = vrcp.pop %v626
    %v718 = vrcp.pop %v629
    %v719 = vmul.f32 %v709, %v717
    %v720 = vmul.f32 %v714, %v718
    %721 = vrot.lane.b32.xlu0 %v111, 116
    %v722 = vpop.permute.xlu0 %721
    %723 = vrot.lane.b32.xlu0 %v116, 116
    %v724 = vpop.permute.xlu0 %723
    %725 = vrot.lane.b32.xlu0 %v111, 84
    %v726 = vpop.permute.xlu0 %725
    %727 = vrot.lane.b32.xlu0 %v116, 84
    %v728 = vpop.permute.xlu0 %727
    %v729 = vsel %vm127, %v722, 0
    %v731 = vsel %vm127, %v724, 0
    %v733 = vsel %vm127, %v726, 0
    %v735 = vsel %vm127, %v728, 0
    %737 = vmatprep.subr.mxu0 0.0
    %738 = vmatpush1.xpose.msra.mxu0 %v733
    %739 = vmatprep.subr.mxu0 0.0
    %740 = vmatpush1.xpose.msra.mxu0 %v735
    %741 = vmatprep.subr.mxu0 0.0
    %742 = vmatpush1.xpose.msra.mxu0 0.0
    %743 = vmatprep.subr.mxu0 0.0
    %744 = vmatpush1.xpose.msra.mxu0 0.0
    %745 = vmatprep.subr.mxu0 0.0
    %746 = vmatpush1.xpose.msra.mxu0 0.0
    %747 = vmatprep.subr.mxu0 0.0
    %748 = vmatpush1.xpose.msra.mxu0 0.0
    %749 = vmatprep.subr.mxu0 0.0
    %750 = vmatpush1.xpose.msra.mxu0 0.0
    %751 = vmatprep.subr.mxu0 0.0
    %752 = vmatpush1.xpose.msra.mxu0 0.0
    %753 = vmatprep.subr.mxu0 0.0
    %754 = vmatpush1.xpose.msra.mxu0 0.0
    %755 = vmatprep.subr.mxu0 0.0
    %756 = vmatpush1.xpose.msra.mxu0 0.0
    %757 = vmatprep.subr.mxu0 0.0
    %758 = vmatpush1.xpose.msra.mxu0 0.0
    %759 = vmatprep.subr.mxu0 0.0
    %760 = vmatpush1.xpose.msra.mxu0 0.0
    %761 = vmatprep.subr.mxu0 0.0
    %762 = vmatpush1.xpose.msra.mxu0 0.0
    %763 = vmatprep.subr.mxu0 0.0
    %764 = vmatpush1.xpose.msra.mxu0 0.0
    %765 = vmatprep.subr.mxu0 0.0
    %766 = vmatpush1.xpose.msra.mxu0 0.0
    %767 = vmatprep.subr.mxu0 0.0
    %768 = vmatpush1.xpose.msra.mxu0 0.0
    %769 = vmatprep.subr.mxu0 0.0
    %770 = vmatpush1.xpose.msra.mxu0 0.0
    %771 = vmatprep.subr.mxu0 0.0
    %772 = vmatpush1.xpose.msra.mxu0 0.0
    %773 = vmatprep.subr.mxu0 0.0
    %774 = vmatpush1.xpose.msra.mxu0 0.0
    %775 = vmatprep.subr.mxu0 0.0
    %776 = vmatpush1.xpose.msra.mxu0 0.0
    %777 = vmatprep.subr.mxu0 0.0
    %778 = vmatpush1.xpose.msra.mxu0 0.0
    %779 = vmatprep.subr.mxu0 0.0
    %780 = vmatpush1.xpose.msra.mxu0 0.0
    %781 = vmatprep.subr.mxu0 0.0
    %782 = vmatpush1.xpose.msra.mxu0 0.0
    %783 = vmatprep.subr.mxu0 0.0
    %784 = vmatpush1.xpose.msra.mxu0 0.0
    %785 = vmatprep.subr.mxu0 0.0
    %786 = vmatpush1.xpose.msra.mxu0 0.0
    %787 = vmatprep.subr.mxu0 0.0
    %788 = vmatpush1.xpose.msra.mxu0 0.0
    %789 = vmatprep.subr.mxu0 0.0
    %790 = vmatpush1.xpose.msra.mxu0 0.0
    %791 = vmatprep.subr.mxu0 0.0
    %792 = vmatpush1.xpose.msra.mxu0 0.0
    %793 = vmatprep.subr.mxu0 0.0
    %794 = vmatpush1.xpose.msra.mxu0 0.0
    %795 = vmatprep.subr.mxu0 0.0
    %796 = vmatpush1.xpose.msra.mxu0 0.0
    %797 = vmatprep.subr.mxu0 0.0
    %798 = vmatpush1.xpose.msra.mxu0 0.0
    %799 = vmatprep.subr.mxu0 0.0
    %800 = vmatpush1.xpose.msra.mxu0 0.0
    %801 = vmatprep.mubr.f32.mxu0 0.0
    %802 = vmatmul.mubr.f32.gmra.mrb[0].mxu0 %v729
    %v803 = vpop.f32.mrb[0].mxu0
    %v804 = vadd.f32 %v119, %v803
    %v805 = vpop.f32.mrb[0].mxu0
    %806 = vmatprep.mubr.f32.mxu0 0.0
    %807 = vmatmul.mubr.f32.gmra.mrb[0].mxu0 %v731
    %v808 = vpop.f32.mrb[0].mxu0
    %v809 = vadd.f32 %v120, %v808
    %v810 = vpop.f32.mrb[0].mxu0
    %811 = vdwg.mxu0
    %v812 = vsel %vm211, %v804, -inf
    %813 = vmax.xlane.f32.xlu0 %v812
    %v814 = vpop.xlane.xlu0 %813
    %v815 = vsel %vm211, %v809, -inf
    %816 = vmax.xlane.f32.xlu0 %v815
    %v817 = vpop.xlane.xlu0 %816
    %v818 = vsub.f32 %v804, %v814
    %v819 = vsub.f32 %v809, %v817
    %v820 = vmul.f32 %v818, 1.442695
    %v821 = vpow.pop %v820
    %v822 = vmul.f32 %v819, 1.442695
    %v823 = vpow.pop %v822
    %v824 = vsel %vm211, %v821, 0.0
    %825 = vadd.xlane.f32.xlu0 %v824
    %v826 = vpop.xlane.xlu0 %825
    %v827 = vsel %vm211, %v823, 0.0
    %828 = vadd.xlane.f32.xlu0 %v827
    %v829 = vpop.xlane.xlu0 %828
    %830 = vrot.lane.b32.xlu0 %v111, 52
    %v831 = vpop.permute.xlu0 %830
    %832 = vrot.lane.b32.xlu0 %v116, 52
    %v833 = vpop.permute.xlu0 %832
    %v837 = vsel %vm211, %v821, 0
    %v840 = vsel %vm211, %v823, 0
    %842 = vmatprep.subr.mxu0 0.0
    %843 = vmatpush1.msra.mxu0 %v831
    %844 = vmatprep.subr.mxu0 0.0
    %845 = vmatpush1.msra.mxu0 %v833
    %846 = vmatprep.subr.mxu0 0.0
    %847 = vmatpush1.msra.mxu0 0.0
    %848 = vmatprep.subr.mxu0 0.0
    %849 = vmatpush1.msra.mxu0 0.0
    %850 = vmatprep.subr.mxu0 0.0
    %851 = vmatpush1.msra.mxu0 0.0
    %852 = vmatprep.subr.mxu0 0.0
    %853 = vmatpush1.msra.mxu0 0.0
    %854 = vmatprep.subr.mxu0 0.0
    %855 = vmatpush1.msra.mxu0 0.0
    %856 = vmatprep.subr.mxu0 0.0
    %857 = vmatpush1.msra.mxu0 0.0
    %858 = vmatprep.subr.mxu0 0.0
    %859 = vmatpush1.msra.mxu0 0.0
    %860 = vmatprep.subr.mxu0 0.0
    %861 = vmatpush1.msra.mxu0 0.0
    %862 = vmatprep.subr.mxu0 0.0
    %863 = vmatpush1.msra.mxu0 0.0
    %864 = vmatprep.subr.mxu0 0.0
    %865 = vmatpush1.msra.mxu0 0.0
    %866 = vmatprep.subr.mxu0 0.0
    %867 = vmatpush1.msra.mxu0 0.0
    %868 = vmatprep.subr.mxu0 0.0
    %869 = vmatpush1.msra.mxu0 0.0
    %870 = vmatprep.subr.mxu0 0.0
    %871 = vmatpush1.msra.mxu0 0.0
    %872 = vmatprep.subr.mxu0 0.0
    %873 = vmatpush1.msra.mxu0 0.0
    %874 = vmatprep.subr.mxu0 0.0
    %875 = vmatpush1.msra.mxu0 0.0
    %876 = vmatprep.subr.mxu0 0.0
    %877 = vmatpush1.msra.mxu0 0.0
    %878 = vmatprep.subr.mxu0 0.0
    %879 = vmatpush1.msra.mxu0 0.0
    %880 = vmatprep.subr.mxu0 0.0
    %881 = vmatpush1.msra.mxu0 0.0
    %882 = vmatprep.subr.mxu0 0.0
    %883 = vmatpush1.msra.mxu0 0.0
    %884 = vmatprep.subr.mxu0 0.0
    %885 = vmatpush1.msra.mxu0 0.0
    %886 = vmatprep.subr.mxu0 0.0
    %887 = vmatpush1.msra.mxu0 0.0
    %888 = vmatprep.subr.mxu0 0.0
    %889 = vmatpush1.msra.mxu0 0.0
    %890 = vmatprep.subr.mxu0 0.0
    %891 = vmatpush1.msra.mxu0 0.0
    %892 = vmatprep.subr.mxu0 0.0
    %893 = vmatpush1.msra.mxu0 0.0
    %894 = vmatprep.subr.mxu0 0.0
    %895 = vmatpush1.msra.mxu0 0.0
    %896 = vmatprep.subr.mxu0 0.0
    %897 = vmatpush1.msra.mxu0 0.0
    %898 = vmatprep.subr.mxu0 0.0
    %899 = vmatpush1.msra.mxu0 0.0
    %900 = vmatprep.subr.mxu0 0.0
    %901 = vmatpush1.msra.mxu0 0.0
    %902 = vmatprep.subr.mxu0 0.0
    %903 = vmatpush1.msra.mxu0 0.0
    %904 = vmatprep.subr.mxu0 0.0
    %905 = vmatpush1.msra.mxu0 0.0
    %906 = vmatprep.mubr.f32.mxu0 0.0
    %907 = vmatmul.mubr.f32.gmra.mrb[0].mxu0 %v837
    %v908 = vpop.f32.mrb[0].mxu0
    %v909 = vadd.f32 0.0, %v908
    %v910 = vpop.f32.mrb[0].mxu0
    %911 = vmatprep.mubr.f32.mxu0 0.0
    %912 = vmatmul.mubr.f32.gmra.mrb[0].mxu0 %v840
    %v913 = vpop.f32.mrb[0].mxu0
    %v914 = vadd.f32 0.0, %v913
    %v915 = vpop.f32.mrb[0].mxu0
    %916 = vdwg.mxu0
    %v917 = vrcp.pop %v826
    %v918 = vrcp.pop %v829
    %v919 = vmul.f32 %v909, %v917
    %v920 = vmul.f32 %v914, %v918
    %921 = vrot.lane.b32.xlu0 %v111, 112
    %v922 = vpop.permute.xlu0 %921
    %923 = vrot.lane.b32.xlu0 %v116, 112
    %v924 = vpop.permute.xlu0 %923
    %925 = vrot.lane.b32.xlu0 %v111, 80
    %v926 = vpop.permute.xlu0 %925
    %927 = vrot.lane.b32.xlu0 %v116, 80
    %v928 = vpop.permute.xlu0 %927
    %v929 = vsel %vm127, %v922, 0
    %v931 = vsel %vm127, %v924, 0
    %v933 = vsel %vm127, %v926, 0
    %v935 = vsel %vm127, %v928, 0
    %937 = vmatprep.subr.mxu0 0.0
    %938 = vmatpush1.xpose.msra.mxu0 %v933
    %939 = vmatprep.subr.mxu0 0.0
    %940 = vmatpush1.xpose.msra.mxu0 %v935
    %941 = vmatprep.subr.mxu0 0.0
    %942 = vmatpush1.xpose.msra.mxu0 0.0
    %943 = vmatprep.subr.mxu0 0.0
    %944 = vmatpush1.xpose.msra.mxu0 0.0
    %945 = vmatprep.subr.mxu0 0.0
    %946 = vmatpush1.xpose.msra.mxu0 0.0
    %947 = vmatprep.subr.mxu0 0.0
    %948 = vmatpush1.xpose.msra.mxu0 0.0
    %949 = vmatprep.subr.mxu0 0.0
    %950 = vmatpush1.xpose.msra.mxu0 0.0
    %951 = vmatprep.subr.mxu0 0.0
    %952 = vmatpush1.xpose.msra.mxu0 0.0
    %953 = vmatprep.subr.mxu0 0.0
    %954 = vmatpush1.xpose.msra.mxu0 0.0
    %955 = vmatprep.subr.mxu0 0.0
    %956 = vmatpush1.xpose.msra.mxu0 0.0
    %957 = vmatprep.subr.mxu0 0.0
    %958 = vmatpush1.xpose.msra.mxu0 0.0
    %959 = vmatprep.subr.mxu0 0.0
    %960 = vmatpush1.xpose.msra.mxu0 0.0
    %961 = vmatprep.subr.mxu0 0.0
    %962 = vmatpush1.xpose.msra.mxu0 0.0
    %963 = vmatprep.subr.mxu0 0.0
    %964 = vmatpush1.xpose.msra.mxu0 0.0
    %965 = vmatprep.subr.mxu0 0.0
    %966 = vmatpush1.xpose.msra.mxu0 0.0
    %967 = vmatprep.subr.mxu0 0.0
    %968 = vmatpush1.xpose.msra.mxu0 0.0
    %969 = vmatprep.subr.mxu0 0.0
    %970 = vmatpush1.xpose.msra.mxu0 0.0
    %971 = vmatprep.subr.mxu0 0.0
    %972 = vmatpush1.xpose.msra.mxu0 0.0
    %973 = vmatprep.subr.mxu0 0.0
    %974 = vmatpush1.xpose.msra.mxu0 0.0
    %975 = vmatprep.subr.mxu0 0.0
    %976 = vmatpush1.xpose.msra.mxu0 0.0
    %977 = vmatprep.subr.mxu0 0.0
    %978 = vmatpush1.xpose.msra.mxu0 0.0
    %979 = vmatprep.subr.mxu0 0.0
    %980 = vmatpush1.xpose.msra.mxu0 0.0
    %981 = vmatprep.subr.mxu0 0.0
    %982 = vmatpush1.xpose.msra.mxu0 0.0
    %983 = vmatprep.subr.mxu0 0.0
    %984 = vmatpush1.xpose.msra.mxu0 0.0
    %985 = vmatprep.subr.mxu0 0.0
    %986 = vmatpush1.xpose.msra.mxu0 0.0
    %987 = vmatprep.subr.mxu0 0.0
    %988 = vmatpush1.xpose.msra.mxu0 0.0
    %989 = vmatprep.subr.mxu0 0.0
    %990 = vmatpush1.xpose.msra.mxu0 0.0
    %991 = vmatprep.subr.mxu0 0.0
    %992 = vmatpush1.xpose.msra.mxu0 0.0
    %993 = vmatprep.subr.mxu0 0.0
    %994 = vmatpush1.xpose.msra.mxu0 0.0
    %995 = vmatprep.subr.mxu0 0.0
    %996 = vmatpush1.xpose.msra.mxu0 0.0
    %997 = vmatprep.subr.mxu0 0.0
    %998 = vmatpush1.xpose.msra.mxu0 0.0
    %999 = vmatprep.subr.mxu0 0.0
    %1000 = vmatpush1.xpose.msra.mxu0 0.0
    %1001 = vmatprep.mubr.f32.mxu0 0.0
    %1002 = vmatmul.mubr.f32.gmra.mrb[0].mxu0 %v929
    %v1003 = vpop.f32.mrb[0].mxu0
    %v1004 = vadd.f32 %v119, %v1003
    %v1005 = vpop.f32.mrb[0].mxu0
    %1006 = vmatprep.mubr.f32.mxu0 0.0
    %1007 = vmatmul.mubr.f32.gmra.mrb[0].mxu0 %v931
    %v1008 = vpop.f32.mrb[0].mxu0
    %v1009 = vadd.f32 %v120, %v1008
    %v1010 = vpop.f32.mrb[0].mxu0
    %1011 = vdwg.mxu0
    %v1012 = vsel %vm211, %v1004, -inf
    %1013 = vmax.xlane.f32.xlu0 %v1012
    %v1014 = vpop.xlane.xlu0 %1013
    %v1015 = vsel %vm211, %v1009, -inf
    %1016 = vmax.xlane.f32.xlu0 %v1015
    %v1017 = vpop.xlane.xlu0 %1016
    %v1018 = vsub.f32 %v1004, %v1014
    %v1019 = vsub.f32 %v1009, %v1017
    %v1020 = vmul.f32 %v1018, 1.442695
    %v1021 = vpow.pop %v1020
    %v1022 = vmul.f32 %v1019, 1.442695
    %v1023 = vpow.pop %v1022
    %v1024 = vsel %vm211, %v1021, 0.0
    %1025 = vadd.xlane.f32.xlu0 %v1024
    %v1026 = vpop.xlane.xlu0 %1025
    %v1027 = vsel %vm211, %v1023, 0.0
    %1028 = vadd.xlane.f32.xlu0 %v1027
    %v1029 = vpop.xlane.xlu0 %1028
    %1030 = vrot.lane.b32.xlu0 %v111, 48
    %v1031 = vpop.permute.xlu0 %1030
    %1032 = vrot.lane.b32.xlu0 %v116, 48
    %v1033 = vpop.permute.xlu0 %1032
    %v1037 = vsel %vm211, %v1021, 0
    %v1040 = vsel %vm211, %v1023, 0
    %1042 = vmatprep.subr.mxu0 0.0
    %1043 = vmatpush1.msra.mxu0 %v1031
    %1044 = vmatprep.subr.mxu0 0.0
    %1045 = vmatpush1.msra.mxu0 %v1033
    %1046 = vmatprep.subr.mxu0 0.0
    %1047 = vmatpush1.msra.mxu0 0.0
    %1048 = vmatprep.subr.mxu0 0.0
    %1049 = vmatpush1.msra.mxu0 0.0
    %1050 = vmatprep.subr.mxu0 0.0
    %1051 = vmatpush1.msra.mxu0 0.0
    %1052 = vmatprep.subr.mxu0 0.0
    %1053 = vmatpush1.msra.mxu0 0.0
    %1054 = vmatprep.subr.mxu0 0.0
    %1055 = vmatpush1.msra.mxu0 0.0
    %1056 = vmatprep.subr.mxu0 0.0
    %1057 = vmatpush1.msra.mxu0 0.0
    %1058 = vmatprep.subr.mxu0 0.0
    %1059 = vmatpush1.msra.mxu0 0.0
    %1060 = vmatprep.subr.mxu0 0.0
    %1061 = vmatpush1.msra.mxu0 0.0
    %1062 = vmatprep.subr.mxu0 0.0
    %1063 = vmatpush1.msra.mxu0 0.0
    %1064 = vmatprep.subr.mxu0 0.0
    %1065 = vmatpush1.msra.mxu0 0.0
    %1066 = vmatprep.subr.mxu0 0.0
    %1067 = vmatpush1.msra.mxu0 0.0
    %1068 = vmatprep.subr.mxu0 0.0
    %1069 = vmatpush1.msra.mxu0 0.0
    %1070 = vmatprep.subr.mxu0 0.0
    %1071 = vmatpush1.msra.mxu0 0.0
    %1072 = vmatprep.subr.mxu0 0.0
    %1073 = vmatpush1.msra.mxu0 0.0
    %1074 = vmatprep.subr.mxu0 0.0
    %1075 = vmatpush1.msra.mxu0 0.0
    %1076 = vmatprep.subr.mxu0 0.0
    %1077 = vmatpush1.msra.mxu0 0.0
    %1078 = vmatprep.subr.mxu0 0.0
    %1079 = vmatpush1.msra.mxu0 0.0
    %1080 = vmatprep.subr.mxu0 0.0
    %1081 = vmatpush1.msra.mxu0 0.0
    %1082 = vmatprep.subr.mxu0 0.0
    %1083 = vmatpush1.msra.mxu0 0.0
    %1084 = vmatprep.subr.mxu0 0.0
    %1085 = vmatpush1.msra.mxu0 0.0
    %1086 = vmatprep.subr.mxu0 0.0
    %1087 = vmatpush1.msra.mxu0 0.0
    %1088 = vmatprep.subr.mxu0 0.0
    %1089 = vmatpush1.msra.mxu0 0.0
    %1090 = vmatprep.subr.mxu0 0.0
    %1091 = vmatpush1.msra.mxu0 0.0
    %1092 = vmatprep.subr.mxu0 0.0
    %1093 = vmatpush1.msra.mxu0 0.0
    %1094 = vmatprep.subr.mxu0 0.0
    %1095 = vmatpush1.msra.mxu0 0.0
    %1096 = vmatprep.subr.mxu0 0.0
    %1097 = vmatpush1.msra.mxu0 0.0
    %1098 = vmatprep.subr.mxu0 0.0
    %1099 = vmatpush1.msra.mxu0 0.0
    %1100 = vmatprep.subr.mxu0 0.0
    %1101 = vmatpush1.msra.mxu0 0.0
    %1102 = vmatprep.subr.mxu0 0.0
    %1103 = vmatpush1.msra.mxu0 0.0
    %1104 = vmatprep.subr.mxu0 0.0
    %1105 = vmatpush1.msra.mxu0 0.0
    %1106 = vmatprep.mubr.f32.mxu0 0.0
    %1107 = vmatmul.mubr.f32.gmra.mrb[0].mxu0 %v1037
    %v1108 = vpop.f32.mrb[0].mxu0
    %v1109 = vadd.f32 0.0, %v1108
    %v1110 = vpop.f32.mrb[0].mxu0
    %1111 = vmatprep.mubr.f32.mxu0 0.0
    %1112 = vmatmul.mubr.f32.gmra.mrb[0].mxu0 %v1040
    %v1113 = vpop.f32.mrb[0].mxu0
    %v1114 = vadd.f32 0.0, %v1113
    %v1115 = vpop.f32.mrb[0].mxu0
    %1116 = vdwg.mxu0
    %v1117 = vrcp.pop %v1026
    %v1118 = vrcp.pop %v1029
    %v1119 = vmul.f32 %v1109, %v1117
    %v1120 = vmul.f32 %v1114, %v1118
    %1121 = vrot.lane.b32.xlu0 %v111, 108
    %v1122 = vpop.permute.xlu0 %1121
    %1123 = vrot.lane.b32.xlu0 %v116, 108
    %v1124 = vpop.permute.xlu0 %1123
    %1125 = vrot.lane.b32.xlu0 %v111, 76
    %v1126 = vpop.permute.xlu0 %1125
    %1127 = vrot.lane.b32.xlu0 %v116, 76
    %v1128 = vpop.permute.xlu0 %1127
    %v1129 = vsel %vm127, %v1122, 0
    %v1131 = vsel %vm127, %v1124, 0
    %v1133 = vsel %vm127, %v1126, 0
    %v1135 = vsel %vm127, %v1128, 0
    %1137 = vmatprep.subr.mxu0 0.0
    %1138 = vmatpush1.xpose.msra.mxu0 %v1133
    %1139 = vmatprep.subr.mxu0 0.0
    %1140 = vmatpush1.xpose.msra.mxu0 %v1135
    %1141 = vmatprep.subr.mxu0 0.0
    %1142 = vmatpush1.xpose.msra.mxu0 0.0
    %1143 = vmatprep.subr.mxu0 0.0
    %1144 = vmatpush1.xpose.msra.mxu0 0.0
    %1145 = vmatprep.subr.mxu0 0.0
    %1146 = vmatpush1.xpose.msra.mxu0 0.0
    %1147 = vmatprep.subr.mxu0 0.0
    %1148 = vmatpush1.xpose.msra.mxu0 0.0
    %1149 = vmatprep.subr.mxu0 0.0
    %1150 = vmatpush1.xpose.msra.mxu0 0.0
    %1151 = vmatprep.subr.mxu0 0.0
    %1152 = vmatpush1.xpose.msra.mxu0 0.0
    %1153 = vmatprep.subr.mxu0 0.0
    %1154 = vmatpush1.xpose.msra.mxu0 0.0
    %1155 = vmatprep.subr.mxu0 0.0
    %1156 = vmatpush1.xpose.msra.mxu0 0.0
    %1157 = vmatprep.subr.mxu0 0.0
    %1158 = vmatpush1.xpose.msra.mxu0 0.0
    %1159 = vmatprep.subr.mxu0 0.0
    %1160 = vmatpush1.xpose.msra.mxu0 0.0
    %1161 = vmatprep.subr.mxu0 0.0
    %1162 = vmatpush1.xpose.msra.mxu0 0.0
    %1163 = vmatprep.subr.mxu0 0.0
    %1164 = vmatpush1.xpose.msra.mxu0 0.0
    %1165 = vmatprep.subr.mxu0 0.0
    %1166 = vmatpush1.xpose.msra.mxu0 0.0
    %1167 = vmatprep.subr.mxu0 0.0
    %1168 = vmatpush1.xpose.msra.mxu0 0.0
    %1169 = vmatprep.subr.mxu0 0.0
    %1170 = vmatpush1.xpose.msra.mxu0 0.0
    %1171 = vmatprep.subr.mxu0 0.0
    %1172 = vmatpush1.xpose.msra.mxu0 0.0
    %1173 = vmatprep.subr.mxu0 0.0
    %1174 = vmatpush1.xpose.msra.mxu0 0.0
    %1175 = vmatprep.subr.mxu0 0.0
    %1176 = vmatpush1.xpose.msra.mxu0 0.0
    %1177 = vmatprep.subr.mxu0 0.0
    %1178 = vmatpush1.xpose.msra.mxu0 0.0
    %1179 = vmatprep.subr.mxu0 0.0
    %1180 = vmatpush1.xpose.msra.mxu0 0.0
    %1181 = vmatprep.subr.mxu0 0.0
    %1182 = vmatpush1.xpose.msra.mxu0 0.0
    %1183 = vmatprep.subr.mxu0 0.0
    %1184 = vmatpush1.xpose.msra.mxu0 0.0
    %1185 = vmatprep.subr.mxu0 0.0
    %1186 = vmatpush1.xpose.msra.mxu0 0.0
    %1187 = vmatprep.subr.mxu0 0.0
    %1188 = vmatpush1.xpose.msra.mxu0 0.0
    %1189 = vmatprep.subr.mxu0 0.0
    %1190 = vmatpush1.xpose.msra.mxu0 0.0
    %1191 = vmatprep.subr.mxu0 0.0
    %1192 = vmatpush1.xpose.msra.mxu0 0.0
    %1193 = vmatprep.subr.mxu0 0.0
    %1194 = vmatpush1.xpose.msra.mxu0 0.0
    %1195 = vmatprep.subr.mxu0 0.0
    %1196 = vmatpush1.xpose.msra.mxu0 0.0
    %1197 = vmatprep.subr.mxu0 0.0
    %1198 = vmatpush1.xpose.msra.mxu0 0.0
    %1199 = vmatprep.subr.mxu0 0.0
    %1200 = vmatpush1.xpose.msra.mxu0 0.0
    %1201 = vmatprep.mubr.f32.mxu0 0.0
    %1202 = vmatmul.mubr.f32.gmra.mrb[0].mxu0 %v1129
    %v1203 = vpop.f32.mrb[0].mxu0
    %v1204 = vadd.f32 %v119, %v1203
    %v1205 = vpop.f32.mrb[0].mxu0
    %1206 = vmatprep.mubr.f32.mxu0 0.0
    %1207 = vmatmul.mubr.f32.gmra.mrb[0].mxu0 %v1131
    %v1208 = vpop.f32.mrb[0].mxu0
    %v1209 = vadd.f32 %v120, %v1208
    %v1210 = vpop.f32.mrb[0].mxu0
    %1211 = vdwg.mxu0
    %v1212 = vsel %vm211, %v1204, -inf
    %1213 = vmax.xlane.f32.xlu0 %v1212
    %v1214 = vpop.xlane.xlu0 %1213
    %v1215 = vsel %vm211, %v1209, -inf
    %1216 = vmax.xlane.f32.xlu0 %v1215
    %v1217 = vpop.xlane.xlu0 %1216
    %v1218 = vsub.f32 %v1204, %v1214
    %v1219 = vsub.f32 %v1209, %v1217
    %v1220 = vmul.f32 %v1218, 1.442695
    %v1221 = vpow.pop %v1220
    %v1222 = vmul.f32 %v1219, 1.442695
    %v1223 = vpow.pop %v1222
    %v1224 = vsel %vm211, %v1221, 0.0
    %1225 = vadd.xlane.f32.xlu0 %v1224
    %v1226 = vpop.xlane.xlu0 %1225
    %v1227 = vsel %vm211, %v1223, 0.0
    %1228 = vadd.xlane.f32.xlu0 %v1227
    %v1229 = vpop.xlane.xlu0 %1228
    %1230 = vrot.lane.b32.xlu0 %v111, 44
    %v1231 = vpop.permute.xlu0 %1230
    %1232 = vrot.lane.b32.xlu0 %v116, 44
    %v1233 = vpop.permute.xlu0 %1232
    %v1237 = vsel %vm211, %v1221, 0
    %v1240 = vsel %vm211, %v1223, 0
    %1242 = vmatprep.subr.mxu0 0.0
    %1243 = vmatpush1.msra.mxu0 %v1231
    %1244 = vmatprep.subr.mxu0 0.0
    %1245 = vmatpush1.msra.mxu0 %v1233
    %1246 = vmatprep.subr.mxu0 0.0
    %1247 = vmatpush1.msra.mxu0 0.0
    %1248 = vmatprep.subr.mxu0 0.0
    %1249 = vmatpush1.msra.mxu0 0.0
    %1250 = vmatprep.subr.mxu0 0.0
    %1251 = vmatpush1.msra.mxu0 0.0
    %1252 = vmatprep.subr.mxu0 0.0
    %1253 = vmatpush1.msra.mxu0 0.0
    %1254 = vmatprep.subr.mxu0 0.0
    %1255 = vmatpush1.msra.mxu0 0.0
    %1256 = vmatprep.subr.mxu0 0.0
    %1257 = vmatpush1.msra.mxu0 0.0
    %1258 = vmatprep.subr.mxu0 0.0
    %1259 = vmatpush1.msra.mxu0 0.0
    %1260 = vmatprep.subr.mxu0 0.0
    %1261 = vmatpush1.msra.mxu0 0.0
    %1262 = vmatprep.subr.mxu0 0.0
    %1263 = vmatpush1.msra.mxu0 0.0
    %1264 = vmatprep.subr.mxu0 0.0
    %1265 = vmatpush1.msra.mxu0 0.0
    %1266 = vmatprep.subr.mxu0 0.0
    %1267 = vmatpush1.msra.mxu0 0.0
    %1268 = vmatprep.subr.mxu0 0.0
    %1269 = vmatpush1.msra.mxu0 0.0
    %1270 = vmatprep.subr.mxu0 0.0
    %1271 = vmatpush1.msra.mxu0 0.0
    %1272 = vmatprep.subr.mxu0 0.0
    %1273 = vmatpush1.msra.mxu0 0.0
    %1274 = vmatprep.subr.mxu0 0.0
    %1275 = vmatpush1.msra.mxu0 0.0
    %1276 = vmatprep.subr.mxu0 0.0
    %1277 = vmatpush1.msra.mxu0 0.0
    %1278 = vmatprep.subr.mxu0 0.0
    %1279 = vmatpush1.msra.mxu0 0.0
    %1280 = vmatprep.subr.mxu0 0.0
    %1281 = vmatpush1.msra.mxu0 0.0
    %1282 = vmatprep.subr.mxu0 0.0
    %1283 = vmatpush1.msra.mxu0 0.0
    %1284 = vmatprep.subr.mxu0 0.0
    %1285 = vmatpush1.msra.mxu0 0.0
    %1286 = vmatprep.subr.mxu0 0.0
    %1287 = vmatpush1.msra.mxu0 0.0
    %1288 = vmatprep.subr.mxu0 0.0
    %1289 = vmatpush1.msra.mxu0 0.0
    %1290 = vmatprep.subr.mxu0 0.0
    %1291 = vmatpush1.msra.mxu0 0.0
    %1292 = vmatprep.subr.mxu0 0.0
    %1293 = vmatpush1.msra.mxu0 0.0
    %1294 = vmatprep.subr.mxu0 0.0
    %1295 = vmatpush1.msra.mxu0 0.0
    %1296 = vmatprep.subr.mxu0 0.0
    %1297 = vmatpush1.msra.mxu0 0.0
    %1298 = vmatprep.subr.mxu0 0.0
    %1299 = vmatpush1.msra.mxu0 0.0
    %1300 = vmatprep.subr.mxu0 0.0
    %1301 = vmatpush1.msra.mxu0 0.0
    %1302 = vmatprep.subr.mxu0 0.0
    %1303 = vmatpush1.msra.mxu0 0.0
    %1304 = vmatprep.subr.mxu0 0.0
    %1305 = vmatpush1.msra.mxu0 0.0
    %1306 = vmatprep.mubr.f32.mxu0 0.0
    %1307 = vmatmul.mubr.f32.gmra.mrb[0].mxu0 %v1237
    %v1308 = vpop.f32.mrb[0].mxu0
    %v1309 = vadd.f32 0.0, %v1308
    %v1310 = vpop.f32.mrb[0].mxu0
    %1311 = vmatprep.mubr.f32.mxu0 0.0
    %1312 = vmatmul.mubr.f32.gmra.mrb[0].mxu0 %v1240
    %v1313 = vpop.f32.mrb[0].mxu0
    %v1314 = vadd.f32 0.0, %v1313
    %v1315 = vpop.f32.mrb[0].mxu0
    %1316 = vdwg.mxu0
    %v1317 = vrcp.pop %v1226
    %v1318 = vrcp.pop %v1229
    %v1319 = vmul.f32 %v1309, %v1317
    %v1320 = vmul.f32 %v1314, %v1318
    %1321 = vrot.lane.b32.xlu0 %v111, 104
    %v1322 = vpop.permute.xlu0 %1321
    %1323 = vrot.lane.b32.xlu0 %v116, 104
    %v1324 = vpop.permute.xlu0 %1323
    %1325 = vrot.lane.b32.xlu0 %v111, 72
    %v1326 = vpop.permute.xlu0 %1325
    %1327 = vrot.lane.b32.xlu0 %v116, 72
    %v1328 = vpop.permute.xlu0 %1327
    %v1329 = vsel %vm127, %v1322, 0
    %v1331 = vsel %vm127, %v1324, 0
    %v1333 = vsel %vm127, %v1326, 0
    %v1335 = vsel %vm127, %v1328, 0
    %1337 = vmatprep.subr.mxu0 0.0
    %1338 = vmatpush1.xpose.msra.mxu0 %v1333
    %1339 = vmatprep.subr.mxu0 0.0
    %1340 = vmatpush1.xpose.msra.mxu0 %v1335
    %1341 = vmatprep.subr.mxu0 0.0
    %1342 = vmatpush1.xpose.msra.mxu0 0.0
    %1343 = vmatprep.subr.mxu0 0.0
    %1344 = vmatpush1.xpose.msra.mxu0 0.0
    %1345 = vmatprep.subr.mxu0 0.0
    %1346 = vmatpush1.xpose.msra.mxu0 0.0
    %1347 = vmatprep.subr.mxu0 0.0
    %1348 = vmatpush1.xpose.msra.mxu0 0.0
    %1349 = vmatprep.subr.mxu0 0.0
    %1350 = vmatpush1.xpose.msra.mxu0 0.0
    %1351 = vmatprep.subr.mxu0 0.0
    %1352 = vmatpush1.xpose.msra.mxu0 0.0
    %1353 = vmatprep.subr.mxu0 0.0
    %1354 = vmatpush1.xpose.msra.mxu0 0.0
    %1355 = vmatprep.subr.mxu0 0.0
    %1356 = vmatpush1.xpose.msra.mxu0 0.0
    %1357 = vmatprep.subr.mxu0 0.0
    %1358 = vmatpush1.xpose.msra.mxu0 0.0
    %1359 = vmatprep.subr.mxu0 0.0
    %1360 = vmatpush1.xpose.msra.mxu0 0.0
    %1361 = vmatprep.subr.mxu0 0.0
    %1362 = vmatpush1.xpose.msra.mxu0 0.0
    %1363 = vmatprep.subr.mxu0 0.0
    %1364 = vmatpush1.xpose.msra.mxu0 0.0
    %1365 = vmatprep.subr.mxu0 0.0
    %1366 = vmatpush1.xpose.msra.mxu0 0.0
    %1367 = vmatprep.subr.mxu0 0.0
    %1368 = vmatpush1.xpose.msra.mxu0 0.0
    %1369 = vmatprep.subr.mxu0 0.0
    %1370 = vmatpush1.xpose.msra.mxu0 0.0
    %1371 = vmatprep.subr.mxu0 0.0
    %1372 = vmatpush1.xpose.msra.mxu0 0.0
    %1373 = vmatprep.subr.mxu0 0.0
    %1374 = vmatpush1.xpose.msra.mxu0 0.0
    %1375 = vmatprep.subr.mxu0 0.0
    %1376 = vmatpush1.xpose.msra.mxu0 0.0
    %1377 = vmatprep.subr.mxu0 0.0
    %1378 = vmatpush1.xpose.msra.mxu0 0.0
    %1379 = vmatprep.subr.mxu0 0.0
    %1380 = vmatpush1.xpose.msra.mxu0 0.0
    %1381 = vmatprep.subr.mxu0 0.0
    %1382 = vmatpush1.xpose.msra.mxu0 0.0
    %1383 = vmatprep.subr.mxu0 0.0
    %1384 = vmatpush1.xpose.msra.mxu0 0.0
    %1385 = vmatprep.subr.mxu0 0.0
    %1386 = vmatpush1.xpose.msra.mxu0 0.0
    %1387 = vmatprep.subr.mxu0 0.0
    %1388 = vmatpush1.xpose.msra.mxu0 0.0
    %1389 = vmatprep.subr.mxu0 0.0
    %1390 = vmatpush1.xpose.msra.mxu0 0.0
    %1391 = vmatprep.subr.mxu0 0.0
    %1392 = vmatpush1.xpose.msra.mxu0 0.0
    %1393 = vmatprep.subr.mxu0 0.0
    %1394 = vmatpush1.xpose.msra.mxu0 0.0
    %1395 = vmatprep.subr.mxu0 0.0
    %1396 = vmatpush1.xpose.msra.mxu0 0.0
    %1397 = vmatprep.subr.mxu0 0.0
    %1398 = vmatpush1.xpose.msra.mxu0 0.0
    %1399 = vmatprep.subr.mxu0 0.0
    %1400 = vmatpush1.xpose.msra.mxu0 0.0
    %1401 = vmatprep.mubr.f32.mxu0 0.0
    %1402 = vmatmul.mubr.f32.gmra.mrb[0].mxu0 %v1329
    %v1403 = vpop.f32.mrb[0].mxu0
    %v1404 = vadd.f32 %v119, %v1403
    %v1405 = vpop.f32.mrb[0].mxu0
    %1406 = vmatprep.mubr.f32.mxu0 0.0
    %1407 = vmatmul.mubr.f32.gmra.mrb[0].mxu0 %v1331
    %v1408 = vpop.f32.mrb[0].mxu0
    %v1409 = vadd.f32 %v120, %v1408
    %v1410 = vpop.f32.mrb[0].mxu0
    %1411 = vdwg.mxu0
    %v1412 = vsel %vm211, %v1404, -inf
    %1413 = vmax.xlane.f32.xlu0 %v1412
    %v1414 = vpop.xlane.xlu0 %1413
    %v1415 = vsel %vm211, %v1409, -inf
    %1416 = vmax.xlane.f32.xlu0 %v1415
    %v1417 = vpop.xlane.xlu0 %1416
    %v1418 = vsub.f32 %v1404, %v1414
    %v1419 = vsub.f32 %v1409, %v1417
    %v1420 = vmul.f32 %v1418, 1.442695
    %v1421 = vpow.pop %v1420
    %v1422 = vmul.f32 %v1419, 1.442695
    %v1423 = vpow.pop %v1422
    %v1424 = vsel %vm211, %v1421, 0.0
    %1425 = vadd.xlane.f32.xlu0 %v1424
    %v1426 = vpop.xlane.xlu0 %1425
    %v1427 = vsel %vm211, %v1423, 0.0
    %1428 = vadd.xlane.f32.xlu0 %v1427
    %v1429 = vpop.xlane.xlu0 %1428
    %1430 = vrot.lane.b32.xlu0 %v111, 40
    %v1431 = vpop.permute.xlu0 %1430
    %1432 = vrot.lane.b32.xlu0 %v116, 40
    %v1433 = vpop.permute.xlu0 %1432
    %v1437 = vsel %vm211, %v1421, 0
    %v1440 = vsel %vm211, %v1423, 0
    %1442 = vmatprep.subr.mxu0 0.0
    %1443 = vmatpush1.msra.mxu0 %v1431
    %1444 = vmatprep.subr.mxu0 0.0
    %1445 = vmatpush1.msra.mxu0 %v1433
    %1446 = vmatprep.subr.mxu0 0.0
    %1447 = vmatpush1.msra.mxu0 0.0
    %1448 = vmatprep.subr.mxu0 0.0
    %1449 = vmatpush1.msra.mxu0 0.0
    %1450 = vmatprep.subr.mxu0 0.0
    %1451 = vmatpush1.msra.mxu0 0.0
    %1452 = vmatprep.subr.mxu0 0.0
    %1453 = vmatpush1.msra.mxu0 0.0
    %1454 = vmatprep.subr.mxu0 0.0
    %1455 = vmatpush1.msra.mxu0 0.0
    %1456 = vmatprep.subr.mxu0 0.0
    %1457 = vmatpush1.msra.mxu0 0.0
    %1458 = vmatprep.subr.mxu0 0.0
    %1459 = vmatpush1.msra.mxu0 0.0
    %1460 = vmatprep.subr.mxu0 0.0
    %1461 = vmatpush1.msra.mxu0 0.0
    %1462 = vmatprep.subr.mxu0 0.0
    %1463 = vmatpush1.msra.mxu0 0.0
    %1464 = vmatprep.subr.mxu0 0.0
    %1465 = vmatpush1.msra.mxu0 0.0
    %1466 = vmatprep.subr.mxu0 0.0
    %1467 = vmatpush1.msra.mxu0 0.0
    %1468 = vmatprep.subr.mxu0 0.0
    %1469 = vmatpush1.msra.mxu0 0.0
    %1470 = vmatprep.subr.mxu0 0.0
    %1471 = vmatpush1.msra.mxu0 0.0
    %1472 = vmatprep.subr.mxu0 0.0
    %1473 = vmatpush1.msra.mxu0 0.0
    %1474 = vmatprep.subr.mxu0 0.0
    %1475 = vmatpush1.msra.mxu0 0.0
    %1476 = vmatprep.subr.mxu0 0.0
    %1477 = vmatpush1.msra.mxu0 0.0
    %1478 = vmatprep.subr.mxu0 0.0
    %1479 = vmatpush1.msra.mxu0 0.0
    %1480 = vmatprep.subr.mxu0 0.0
    %1481 = vmatpush1.msra.mxu0 0.0
    %1482 = vmatprep.subr.mxu0 0.0
    %1483 = vmatpush1.msra.mxu0 0.0
    %1484 = vmatprep.subr.mxu0 0.0
    %1485 = vmatpush1.msra.mxu0 0.0
    %1486 = vmatprep.subr.mxu0 0.0
    %1487 = vmatpush1.msra.mxu0 0.0
    %1488 = vmatprep.subr.mxu0 0.0
    %1489 = vmatpush1.msra.mxu0 0.0
    %1490 = vmatprep.subr.mxu0 0.0
    %1491 = vmatpush1.msra.mxu0 0.0
    %1492 = vmatprep.subr.mxu0 0.0
    %1493 = vmatpush1.msra.mxu0 0.0
    %1494 = vmatprep.subr.mxu0 0.0
    %1495 = vmatpush1.msra.mxu0 0.0
    %1496 = vmatprep.subr.mxu0 0.0
    %1497 = vmatpush1.msra.mxu0 0.0
    %1498 = vmatprep.subr.mxu0 0.0
    %1499 = vmatpush1.msra.mxu0 0.0
    %1500 = vmatprep.subr.mxu0 0.0
    %1501 = vmatpush1.msra.mxu0 0.0
    %1502 = vmatprep.subr.mxu0 0.0
    %1503 = vmatpush1.msra.mxu0 0.0
    %1504 = vmatprep.subr.mxu0 0.0
    %1505 = vmatpush1.msra.mxu0 0.0
    %1506 = vmatprep.mubr.f32.mxu0 0.0
    %1507 = vmatmul.mubr.f32.gmra.mrb[0].mxu0 %v1437
    %v1508 = vpop.f32.mrb[0].mxu0
    %v1509 = vadd.f32 0.0, %v1508
    %v1510 = vpop.f32.mrb[0].mxu0
    %1511 = vmatprep.mubr.f32.mxu0 0.0
    %1512 = vmatmul.mubr.f32.gmra.mrb[0].mxu0 %v1440
    %v1513 = vpop.f32.mrb[0].mxu0
    %v1514 = vadd.f32 0.0, %v1513
    %v1515 = vpop.f32.mrb[0].mxu0
    %1516 = vdwg.mxu0
    %v1517 = vrcp.pop %v1426
    %v1518 = vrcp.pop %v1429
    %v1519 = vmul.f32 %v1509, %v1517
    %v1520 = vmul.f32 %v1514, %v1518
    %1521 = vrot.lane.b32.xlu0 %v111, 100
    %v1522 = vpop.permute.xlu0 %1521
    %1523 = vrot.lane.b32.xlu0 %v116, 100
    %v1524 = vpop.permute.xlu0 %1523
    %1525 = vrot.lane.b32.xlu0 %v111, 68
    %v1526 = vpop.permute.xlu0 %1525
    %1527 = vrot.lane.b32.xlu0 %v116, 68
    %v1528 = vpop.permute.xlu0 %1527
    %v1529 = vsel %vm127, %v1522, 0
    %v1531 = vsel %vm127, %v1524, 0
    %v1533 = vsel %vm127, %v1526, 0
    %v1535 = vsel %vm127, %v1528, 0
    %1537 = vmatprep.subr.mxu0 0.0
    %1538 = vmatpush1.xpose.msra.mxu0 %v1533
    %1539 = vmatprep.subr.mxu0 0.0
    %1540 = vmatpush1.xpose.msra.mxu0 %v1535
    %1541 = vmatprep.subr.mxu0 0.0
    %1542 = vmatpush1.xpose.msra.mxu0 0.0
    %1543 = vmatprep.subr.mxu0 0.0
    %1544 = vmatpush1.xpose.msra.mxu0 0.0
    %1545 = vmatprep.subr.mxu0 0.0
    %1546 = vmatpush1.xpose.msra.mxu0 0.0
    %1547 = vmatprep.subr.mxu0 0.0
    %1548 = vmatpush1.xpose.msra.mxu0 0.0
    %1549 = vmatprep.subr.mxu0 0.0
    %1550 = vmatpush1.xpose.msra.mxu0 0.0
    %1551 = vmatprep.subr.mxu0 0.0
    %1552 = vmatpush1.xpose.msra.mxu0 0.0
    %1553 = vmatprep.subr.mxu0 0.0
    %1554 = vmatpush1.xpose.msra.mxu0 0.0
    %1555 = vmatprep.subr.mxu0 0.0
    %1556 = vmatpush1.xpose.msra.mxu0 0.0
    %1557 = vmatprep.subr.mxu0 0.0
    %1558 = vmatpush1.xpose.msra.mxu0 0.0
    %1559 = vmatprep.subr.mxu0 0.0
    %1560 = vmatpush1.xpose.msra.mxu0 0.0
    %1561 = vmatprep.subr.mxu0 0.0
    %1562 = vmatpush1.xpose.msra.mxu0 0.0
    %1563 = vmatprep.subr.mxu0 0.0
    %1564 = vmatpush1.xpose.msra.mxu0 0.0
    %1565 = vmatprep.subr.mxu0 0.0
    %1566 = vmatpush1.xpose.msra.mxu0 0.0
    %1567 = vmatprep.subr.mxu0 0.0
    %1568 = vmatpush1.xpose.msra.mxu0 0.0
    %1569 = vmatprep.subr.mxu0 0.0
    %1570 = vmatpush1.xpose.msra.mxu0 0.0
    %1571 = vmatprep.subr.mxu0 0.0
    %1572 = vmatpush1.xpose.msra.mxu0 0.0
    %1573 = vmatprep.subr.mxu0 0.0
    %1574 = vmatpush1.xpose.msra.mxu0 0.0
    %1575 = vmatprep.subr.mxu0 0.0
    %1576 = vmatpush1.xpose.msra.mxu0 0.0
    %1577 = vmatprep.subr.mxu0 0.0
    %1578 = vmatpush1.xpose.msra.mxu0 0.0
    %1579 = vmatprep.subr.mxu0 0.0
    %1580 = vmatpush1.xpose.msra.mxu0 0.0
    %1581 = vmatprep.subr.mxu0 0.0
    %1582 = vmatpush1.xpose.msra.mxu0 0.0
    %1583 = vmatprep.subr.mxu0 0.0
    %1584 = vmatpush1.xpose.msra.mxu0 0.0
    %1585 = vmatprep.subr.mxu0 0.0
    %1586 = vmatpush1.xpose.msra.mxu0 0.0
    %1587 = vmatprep.subr.mxu0 0.0
    %1588 = vmatpush1.xpose.msra.mxu0 0.0
    %1589 = vmatprep.subr.mxu0 0.0
    %1590 = vmatpush1.xpose.msra.mxu0 0.0
    %1591 = vmatprep.subr.mxu0 0.0
    %1592 = vmatpush1.xpose.msra.mxu0 0.0
    %1593 = vmatprep.subr.mxu0 0.0
    %1594 = vmatpush1.xpose.msra.mxu0 0.0
    %1595 = vmatprep.subr.mxu0 0.0
    %1596 = vmatpush1.xpose.msra.mxu0 0.0
    %1597 = vmatprep.subr.mxu0 0.0
    %1598 = vmatpush1.xpose.msra.mxu0 0.0
    %1599 = vmatprep.subr.mxu0 0.0
    %1600 = vmatpush1.xpose.msra.mxu0 0.0
    %1601 = vmatprep.mubr.f32.mxu0 0.0
    %1602 = vmatmul.mubr.f32.gmra.mrb[0].mxu0 %v1529
    %v1603 = vpop.f32.mrb[0].mxu0
    %v1604 = vadd.f32 %v119, %v1603
    %v1605 = vpop.f32.mrb[0].mxu0
    %1606 = vmatprep.mubr.f32.mxu0 0.0
    %1607 = vmatmul.mubr.f32.gmra.mrb[0].mxu0 %v1531
    %v1608 = vpop.f32.mrb[0].mxu0
    %v1609 = vadd.f32 %v120, %v1608
    %v1610 = vpop.f32.mrb[0].mxu0
    %1611 = vdwg.mxu0
    %v1612 = vsel %vm211, %v1604, -inf
    %1613 = vmax.xlane.f32.xlu0 %v1612
    %v1614 = vpop.xlane.xlu0 %1613
    %v1615 = vsel %vm211, %v1609, -inf
    %1616 = vmax.xlane.f32.xlu0 %v1615
    %v1617 = vpop.xlane.xlu0 %1616
    %v1618 = vsub.f32 %v1604, %v1614
    %v1619 = vsub.f32 %v1609, %v1617
    %v1620 = vmul.f32 %v1618, 1.442695
    %v1621 = vpow.pop %v1620
    %v1622 = vmul.f32 %v1619, 1.442695
    %v1623 = vpow.pop %v1622
    %v1624 = vsel %vm211, %v1621, 0.0
    %1625 = vadd.xlane.f32.xlu0 %v1624
    %v1626 = vpop.xlane.xlu0 %1625
    %v1627 = vsel %vm211, %v1623, 0.0
    %1628 = vadd.xlane.f32.xlu0 %v1627
    %v1629 = vpop.xlane.xlu0 %1628
    %1630 = vrot.lane.b32.xlu0 %v111, 36
    %v1631 = vpop.permute.xlu0 %1630
    %1632 = vrot.lane.b32.xlu0 %v116, 36
    %v1633 = vpop.permute.xlu0 %1632
    %v1637 = vsel %vm211, %v1621, 0
    %v1640 = vsel %vm211, %v1623, 0
    %1642 = vmatprep.subr.mxu0 0.0
    %1643 = vmatpush1.msra.mxu0 %v1631
    %1644 = vmatprep.subr.mxu0 0.0
    %1645 = vmatpush1.msra.mxu0 %v1633
    %1646 = vmatprep.subr.mxu0 0.0
    %1647 = vmatpush1.msra.mxu0 0.0
    %1648 = vmatprep.subr.mxu0 0.0
    %1649 = vmatpush1.msra.mxu0 0.0
    %1650 = vmatprep.subr.mxu0 0.0
    %1651 = vmatpush1.msra.mxu0 0.0
    %1652 = vmatprep.subr.mxu0 0.0
    %1653 = vmatpush1.msra.mxu0 0.0
    %1654 = vmatprep.subr.mxu0 0.0
    %1655 = vmatpush1.msra.mxu0 0.0
    %1656 = vmatprep.subr.mxu0 0.0
    %1657 = vmatpush1.msra.mxu0 0.0
    %1658 = vmatprep.subr.mxu0 0.0
    %1659 = vmatpush1.msra.mxu0 0.0
    %1660 = vmatprep.subr.mxu0 0.0
    %1661 = vmatpush1.msra.mxu0 0.0
    %1662 = vmatprep.subr.mxu0 0.0
    %1663 = vmatpush1.msra.mxu0 0.0
    %1664 = vmatprep.subr.mxu0 0.0
    %1665 = vmatpush1.msra.mxu0 0.0
    %1666 = vmatprep.subr.mxu0 0.0
    %1667 = vmatpush1.msra.mxu0 0.0
    %1668 = vmatprep.subr.mxu0 0.0
    %1669 = vmatpush1.msra.mxu0 0.0
    %1670 = vmatprep.subr.mxu0 0.0
    %1671 = vmatpush1.msra.mxu0 0.0
    %1672 = vmatprep.subr.mxu0 0.0
    %1673 = vmatpush1.msra.mxu0 0.0
    %1674 = vmatprep.subr.mxu0 0.0
    %1675 = vmatpush1.msra.mxu0 0.0
    %1676 = vmatprep.subr.mxu0 0.0
    %1677 = vmatpush1.msra.mxu0 0.0
    %1678 = vmatprep.subr.mxu0 0.0
    %1679 = vmatpush1.msra.mxu0 0.0
    %1680 = vmatprep.subr.mxu0 0.0
    %1681 = vmatpush1.msra.mxu0 0.0
    %1682 = vmatprep.subr.mxu0 0.0
    %1683 = vmatpush1.msra.mxu0 0.0
    %1684 = vmatprep.subr.mxu0 0.0
    %1685 = vmatpush1.msra.mxu0 0.0
    %1686 = vmatprep.subr.mxu0 0.0
    %1687 = vmatpush1.msra.mxu0 0.0
    %1688 = vmatprep.subr.mxu0 0.0
    %1689 = vmatpush1.msra.mxu0 0.0
    %1690 = vmatprep.subr.mxu0 0.0
    %1691 = vmatpush1.msra.mxu0 0.0
    %1692 = vmatprep.subr.mxu0 0.0
    %1693 = vmatpush1.msra.mxu0 0.0
    %1694 = vmatprep.subr.mxu0 0.0
    %1695 = vmatpush1.msra.mxu0 0.0
    %1696 = vmatprep.subr.mxu0 0.0
    %1697 = vmatpush1.msra.mxu0 0.0
    %1698 = vmatprep.subr.mxu0 0.0
    %1699 = vmatpush1.msra.mxu0 0.0
    %1700 = vmatprep.subr.mxu0 0.0
    %1701 = vmatpush1.msra.mxu0 0.0
    %1702 = vmatprep.subr.mxu0 0.0
    %1703 = vmatpush1.msra.mxu0 0.0
    %1704 = vmatprep.subr.mxu0 0.0
    %1705 = vmatpush1.msra.mxu0 0.0
    %1706 = vmatprep.mubr.f32.mxu0 0.0
    %1707 = vmatmul.mubr.f32.gmra.mrb[0].mxu0 %v1637
    %v1708 = vpop.f32.mrb[0].mxu0
    %v1709 = vadd.f32 0.0, %v1708
    %v1710 = vpop.f32.mrb[0].mxu0
    %1711 = vmatprep.mubr.f32.mxu0 0.0
    %1712 = vmatmul.mubr.f32.gmra.mrb[0].mxu0 %v1640
    %v1713 = vpop.f32.mrb[0].mxu0
    %v1714 = vadd.f32 0.0, %v1713
    %v1715 = vpop.f32.mrb[0].mxu0
    %1716 = vdwg.mxu0
    %v1717 = vrcp.pop %v1626
    %v1718 = vrcp.pop %v1629
    %v1719 = vmul.f32 %v1709, %v1717
    %v1720 = vmul.f32 %v1714, %v1718
    %1723 = vrot.lane.b32.xlu0 %v519, 4
    %v1724 = vpop.permute.xlu0 %1723
    %1725 = vrot.lane.b32.xlu0 %v520, 4
    %v1726 = vpop.permute.xlu0 %1725
    %1731 = vrot.lane.b32.xlu0 %v719, 8
    %v1732 = vpop.permute.xlu0 %1731
    %1733 = vrot.lane.b32.xlu0 %v720, 8
    %v1734 = vpop.permute.xlu0 %1733
    %1739 = vrot.lane.b32.xlu0 %v919, 12
    %v1740 = vpop.permute.xlu0 %1739
    %1741 = vrot.lane.b32.xlu0 %v920, 12
    %v1742 = vpop.permute.xlu0 %1741
    %1747 = vrot.lane.b32.xlu0 %v1119, 16
    %v1748 = vpop.permute.xlu0 %1747
    %1749 = vrot.lane.b32.xlu0 %v1120, 16
    %v1750 = vpop.permute.xlu0 %1749
    %1755 = vrot.lane.b32.xlu0 %v1319, 20
    %v1756 = vpop.permute.xlu0 %1755
    %1757 = vrot.lane.b32.xlu0 %v1320, 20
    %v1758 = vpop.permute.xlu0 %1757
    %1763 = vrot.lane.b32.xlu0 %v1519, 24
    %v1764 = vpop.permute.xlu0 %1763
    %1765 = vrot.lane.b32.xlu0 %v1520, 24
    %v1766 = vpop.permute.xlu0 %1765
    %1771 = vrot.lane.b32.xlu0 %v1719, 28
    %v1772 = vpop.permute.xlu0 %1771
    %1773 = vrot.lane.b32.xlu0 %v1720, 28
    %v1774 = vpop.permute.xlu0 %1773
    %v1777 = vsel %vm127, %v319, %v1724
    %v1778 = vsel %vm127, %v320, %v1726
    %vm1779 = vcmask 64512
    %v1780 = vsel %vm1779, %v1777, %v1732
    %v1781 = vsel %vm1779, %v1778, %v1734
    %vm1782 = vcmask 97280
    %v1783 = vsel %vm1782, %v1780, %v1740
    %v1784 = vsel %vm1782, %v1781, %v1742
    %v1785 = vsel %vm211, %v1783, %v1748
    %v1786 = vsel %vm211, %v1784, %v1750
    %vm1787 = vcmask 162816
    %v1788 = vsel %vm1787, %v1785, %v1756
    %v1789 = vsel %vm1787, %v1786, %v1758
    %vm1790 = vcmask 195584
    %v1791 = vsel %vm1790, %v1788, %v1764
    %v1792 = vsel %vm1790, %v1789, %v1766
    %vm1793 = vcmask 228352
    %v1794 = vsel %vm1793, %v1791, %v1772
    %v1795 = vsel %vm1793, %v1792, %v1774
    %v1796 = vld [vmem:[%s3] sm:$0xff]
    %v1797 = vld [vmem:[%s3 + $0x8] sm:$0xff]
    %v1798 = vld [vmem:[%s3 + $0x10] sm:$0xff]
    %v1799 = vld [vmem:[%s3 + $0x18] sm:$0xff]
    %v1800 = vld [vmem:[%s4] sm:$0x1]
    %v1802 = vlaneseq
    %v1803 = vshrl.u32 %v1802, 7
    %v1804 = vsub.s32 0, %v1803
    %v1805 = vrot.slane %v1800, %v1804
    %v1808 = vsel %vm37, %v1794, 0
    %v1811 = vsel %vm37, %v1795, 0
    %1813 = vmatprep.subr.mxu0 0.0
    %1814 = vmatpush1.msra.mxu0 %v1796
    %1815 = vmatprep.subr.mxu0 0.0
    %1816 = vmatpush1.msra.mxu0 %v1797
    %1817 = vmatprep.subr.mxu0 0.0
    %1818 = vmatpush1.msra.mxu0 %v1798
    %1819 = vmatprep.subr.mxu0 0.0
    %1820 = vmatpush1.msra.mxu0 %v1799
    %1821 = vmatprep.subr.mxu0 0.0
    %1822 = vmatpush1.msra.mxu0 0.0
    %1823 = vmatprep.subr.mxu0 0.0
    %1824 = vmatpush1.msra.mxu0 0.0
    %1825 = vmatprep.subr.mxu0 0.0
    %1826 = vmatpush1.msra.mxu0 0.0
    %1827 = vmatprep.subr.mxu0 0.0
    %1828 = vmatpush1.msra.mxu0 0.0
    %1829 = vmatprep.subr.mxu0 0.0
    %1830 = vmatpush1.msra.mxu0 0.0
    %1831 = vmatprep.subr.mxu0 0.0
    %1832 = vmatpush1.msra.mxu0 0.0
    %1833 = vmatprep.subr.mxu0 0.0
    %1834 = vmatpush1.msra.mxu0 0.0
    %1835 = vmatprep.subr.mxu0 0.0
    %1836 = vmatpush1.msra.mxu0 0.0
    %1837 = vmatprep.subr.mxu0 0.0
    %1838 = vmatpush1.msra.mxu0 0.0
    %1839 = vmatprep.subr.mxu0 0.0
    %1840 = vmatpush1.msra.mxu0 0.0
    %1841 = vmatprep.subr.mxu0 0.0
    %1842 = vmatpush1.msra.mxu0 0.0
    %1843 = vmatprep.subr.mxu0 0.0
    %1844 = vmatpush1.msra.mxu0 0.0
    %1845 = vmatprep.subr.mxu0 0.0
    %1846 = vmatpush1.msra.mxu0 0.0
    %1847 = vmatprep.subr.mxu0 0.0
    %1848 = vmatpush1.msra.mxu0 0.0
    %1849 = vmatprep.subr.mxu0 0.0
    %1850 = vmatpush1.msra.mxu0 0.0
    %1851 = vmatprep.subr.mxu0 0.0
    %1852 = vmatpush1.msra.mxu0 0.0
    %1853 = vmatprep.subr.mxu0 0.0
    %1854 = vmatpush1.msra.mxu0 0.0
    %1855 = vmatprep.subr.mxu0 0.0
    %1856 = vmatpush1.msra.mxu0 0.0
    %1857 = vmatprep.subr.mxu0 0.0
    %1858 = vmatpush1.msra.mxu0 0.0
    %1859 = vmatprep.subr.mxu0 0.0
    %1860 = vmatpush1.msra.mxu0 0.0
    %1861 = vmatprep.subr.mxu0 0.0
    %1862 = vmatpush1.msra.mxu0 0.0
    %1863 = vmatprep.subr.mxu0 0.0
    %1864 = vmatpush1.msra.mxu0 0.0
    %1865 = vmatprep.subr.mxu0 0.0
    %1866 = vmatpush1.msra.mxu0 0.0
    %1867 = vmatprep.subr.mxu0 0.0
    %1868 = vmatpush1.msra.mxu0 0.0
    %1869 = vmatprep.subr.mxu0 0.0
    %1870 = vmatpush1.msra.mxu0 0.0
    %1871 = vmatprep.subr.mxu0 0.0
    %1872 = vmatpush1.msra.mxu0 0.0
    %1873 = vmatprep.subr.mxu0 0.0
    %1874 = vmatpush1.msra.mxu0 0.0
    %1875 = vmatprep.subr.mxu0 0.0
    %1876 = vmatpush1.msra.mxu0 0.0
    %1877 = vmatprep.mubr.f32.mxu0 0.0
    %1878 = vmatmul.mubr.f32.gmra.mrb[0].mxu0 %v1808
    %v1879 = vpop.f32.mrb[0].mxu0
    %v1880 = vadd.f32 %v1805, %v1879
    %v1881 = vpop.f32.mrb[0].mxu0
    %1882 = vmatprep.mubr.f32.mxu0 0.0
    %1883 = vmatmul.mubr.f32.gmra.mrb[0].mxu0 %v1811
    %v1884 = vpop.f32.mrb[0].mxu0
    %v1885 = vadd.f32 %v1805, %v1884
    %v1886 = vpop.f32.mrb[0].mxu0
    %1887 = vdwg.mxu0
    %1888 = vst.msk [vmem:[#allocation2] sm:$0xff] %vm37, %v1880
    %1889 = vst.msk [vmem:[#allocation2 + $0x8] sm:$0xff] %vm37, %v1885
    // Predicated region
    $region26: #{attention_forward.1} parent=1 // pred_check
      _
    $region27: #{attention_forward.1} parent=1 // pred_check_branch
      %1891 = sbr.rel (0) target = $region29
    $region28: #{attention_forward.1} parent=1 // pred_region
      %s1893 = ssub.s32 256, 256
      %1894 = vsyncadd [#allocation3], %s1893
      %s1895 = sshll.u32 [#allocation2], 4
      %s1896 = int_to_ptr.vmem [resolvable:$true] %s1895
      %1901 = dma.vmem_to_hbm [thread:$0]  %s1896, 256, %s6, [#allocation3], 128, 128, 8
    $region29: #{attention_forward.1} parent=1 // pred_fallthru
      _
    // Predicated region
    $region30: #{attention_forward.1} parent=1 // pred_check
      _
    $region31: #{attention_forward.1} parent=1 // pred_check_branch
      %1903 = sbr.rel (0) target = $region33
    $region32: #{attention_forward.1} parent=1 // pred_region
      %1904 = dma.done [#allocation3], 256
    $region33: #{attention_forward.1} parent=1 // pred_fallthru
      _
    %1905 = vsyncpa [#allocation3], 1

</llo_original>
